<compile_context>
chip_gen: v7x
topology: tpu7x:2x2x1
jax: 0.10.0
libtpu: 0.0.40
codegen_flags: <defaults>
</compile_context>

<pallas_src>
import functools
import math

import jax
import jax.numpy as jnp
from jax.experimental import pallas as pl
from jax.experimental.pallas import tpu as pltpu

TM = 512          # conv lane tile over the flattened spatial dim (multiple of 128)


# ----------------------------- Pallas kernels ------------------------------

def _pool_pad_kernel(x_ref, sce_ref, sco_ref, o_ref, *, n, cin, hp, wp, row_w):
    """Fused MaxPool2d(2) + zero-pad + relayout into one flat canvas slot.

    x_ref:   (cin*hp, 2*w) zero-copy row-pair view of one sample
             (lanes [0,w) = even rows, lanes [w,2w) = odd rows).
    o_ref:   (cin_p, ps_r) lane-dense flat canvas slot for this sample.
    Grid may extend past n samples to zero-fill the canvas rounding gap.
    """
    i = pl.program_id(0)
    w = sce_ref.shape[0]
    o_ref[...] = jnp.zeros_like(o_ref)

    @pl.when(i < n)
    def _():
        xm = x_ref[...]                                       # (cin*hp, 2*w)
        rmax = jnp.maximum(xm[:, :w], xm[:, w:])              # row-pair max (VPU)
        # column downsample via tiny cin-independent 0/1 pick matrices (MXU)
        c_even = jnp.dot(rmax, sce_ref[...], preferred_element_type=jnp.float32)
        c_odd = jnp.dot(rmax, sco_ref[...], preferred_element_type=jnp.float32)
        pooled = jnp.maximum(c_even, c_odd).reshape(cin, hp, wp)
        # scatter the hp pooled rows into the padded flat slot (VMEM stores only)
        for r in range(hp):
            base = (r + 1) * row_w + 1
            o_ref[0:cin, base:base + wp] = pooled[:, r, :]


def _conv_stats_kernel(left_ref, cen_ref, right_ref, w_ref, b_ref, mask_ref,
                       o_ref, sum_ref, ssq_ref, wide_ref, slab_ref,
                       *, row_w, tm):
    """Conv3x3(SAME) on the flat canvas + exact batch-stat accumulation.

    Single pass over lane tiles: writes the masked pre-BN canvas tile and
    accumulates per-channel sum / sum-of-squares into VMEM-resident outputs.
    """
    t = pl.program_id(0)
    cin_p = cen_ref.shape[0]

    # Stage [left-halo(128) | center(tm) | right-halo(128)] contiguously in VMEM.
    wide_ref[:, 0:128] = left_ref[...]
    wide_ref[:, 128:128 + tm] = cen_ref[...]
    wide_ref[:, 128 + tm:256 + tm] = right_ref[...]

    # dy-shifted slab: rows [j*cin_p:(j+1)*cin_p] = canvas shifted by (j-1)*row_w,
    # widened by one lane on each side so the dx shifts are static slices.
    for j in range(3):
        s = 128 + (j - 1) * row_w - 1
        slab_ref[j * cin_p:(j + 1) * cin_p, :] = wide_ref[:, s:s + tm + 2]

    # 3 MXU matmuls with K = 3*cin_p (dy and cin folded), one per dx shift.
    acc = b_ref[...]                                          # conv bias (cout_p, 1)
    for x in range(3):
        acc = acc + jnp.dot(w_ref[x], slab_ref[:, x:x + tm],
                            preferred_element_type=jnp.float32)

    valid = mask_ref[...] > 0.5                               # (1, tm)
    am = jnp.where(valid, acc, 0.0)                           # exclude pad lanes

    @pl.when(t == 0)
    def _init_stats():
        sum_ref[...] = jnp.zeros_like(sum_ref)
        ssq_ref[...] = jnp.zeros_like(ssq_ref)

    sum_ref[...] += jnp.sum(am, axis=1, keepdims=True)
    ssq_ref[...] += jnp.sum(am * am, axis=1, keepdims=True)
    o_ref[...] = am                                           # masked pre-BN canvas


def _bn_apply_kernel(x_ref, scale_ref, shift_ref, mask_ref, o_ref):
    """Folded BatchNorm (scale/shift) + ReLU + pad-lane re-zero (pure VPU)."""
    y = jnp.maximum(x_ref[...] * scale_ref[...] + shift_ref[...], 0.0)
    o_ref[...] = jnp.where(mask_ref[...] > 0.5, y, 0.0).astype(o_ref.dtype)


# ------------------------------ JAX wrappers --------------------------------

def _round_up(a, b):
    return ((a + b - 1) // b) * b


def _pool_to_canvas(x, *, cin_p, hp, wp, row_w, ps_r, L):
    """MaxPool2d(2) + pad + relayout directly into the flat (cin_p, L) canvas."""
    n, cin, h, w = x.shape
    f32 = jnp.float32
    x3 = x.reshape(n, cin * hp, 2 * w)            # zero-copy row-pair view
    ci = jnp.arange(wp)
    rows = jnp.arange(w)[:, None]
    sce = (rows == (2 * ci)[None, :]).astype(f32)          # (w, wp) pick even cols
    sco = (rows == (2 * ci + 1)[None, :]).astype(f32)      # (w, wp) pick odd cols

    nblk = L // ps_r
    kern = functools.partial(_pool_pad_kernel, n=n, cin=cin, hp=hp, wp=wp,
                             row_w=row_w)
    return pl.pallas_call(
        kern,
        grid=(nblk,),
        in_specs=[
            pl.BlockSpec((None, cin * hp, 2 * w),
                         lambda i: (jnp.minimum(i, n - 1), 0, 0)),
            pl.BlockSpec((w, wp), lambda i: (0, 0)),
            pl.BlockSpec((w, wp), lambda i: (0, 0)),
        ],
        out_specs=pl.BlockSpec((cin_p, ps_r), lambda i: (0, i)),
        out_shape=jax.ShapeDtypeStruct((cin_p, L), f32),
        compiler_params=pltpu.CompilerParams(
            dimension_semantics=("parallel",)),
    )(x3, sce, sco)


def _conv_stats(canvas, w3, b, mask, *, row_w, tm):
    """Conv3x3 over the flat canvas; returns (pre-BN canvas, sum, sum_sq)."""
    cin_p, L = canvas.shape
    cout_p = w3.shape[1]
    nt = L // tm
    tpb = tm // 128
    nb128 = L // 128
    kern = functools.partial(_conv_stats_kernel, row_w=row_w, tm=tm)
    return pl.pallas_call(
        kern,
        grid=(nt,),
        in_specs=[
            # fixed 128-lane halo blocks (clamped at the canvas ends)
            pl.BlockSpec((cin_p, 128),
                         lambda t: (0, jnp.maximum(t * tpb - 1, 0))),
            pl.BlockSpec((cin_p, tm), lambda t: (0, t)),
            pl.BlockSpec((cin_p, 128),
                         lambda t: (0, jnp.minimum((t + 1) * tpb, nb128 - 1))),
            pl.BlockSpec((3, cout_p, 3 * cin_p), lambda t: (0, 0, 0)),
            pl.BlockSpec((cout_p, 1), lambda t: (0, 0)),
            pl.BlockSpec((1, tm), lambda t: (0, t)),
        ],
        out_specs=(
            pl.BlockSpec((cout_p, tm), lambda t: (0, t)),     # pre-BN canvas
            pl.BlockSpec((cout_p, 1), lambda t: (0, 0)),      # sum   (resident)
            pl.BlockSpec((cout_p, 1), lambda t: (0, 0)),      # sumsq (resident)
        ),
        out_shape=(
            jax.ShapeDtypeStruct((cout_p, L), jnp.float32),
            jax.ShapeDtypeStruct((cout_p, 1), jnp.float32),
            jax.ShapeDtypeStruct((cout_p, 1), jnp.float32),
        ),
        scratch_shapes=[
            pltpu.VMEM((cin_p, tm + 256), jnp.float32),       # [L|C|R] staging
            pltpu.VMEM((3 * cin_p, tm + 2), jnp.float32),     # dy-shifted slab
        ],
        compiler_params=pltpu.CompilerParams(
            # BN stats accumulate across tiles -> sequential on one core.
            dimension_semantics=("arbitrary",)),
    )(canvas, canvas, canvas, w3, b, mask)


def _bn_apply(pre, scale, shift, mask, *, tm):
    """Elementwise BN scale/shift + ReLU + mask over the whole canvas."""
    cout_p, L = pre.shape
    return pl.pallas_call(
        _bn_apply_kernel,
        grid=(L // tm,),
        in_specs=[
            pl.BlockSpec((cout_p, tm), lambda t: (0, t)),
            pl.BlockSpec((cout_p, 1), lambda t: (0, 0)),
            pl.BlockSpec((cout_p, 1), lambda t: (0, 0)),
            pl.BlockSpec((1, tm), lambda t: (0, t)),
        ],
        out_specs=pl.BlockSpec((cout_p, tm), lambda t: (0, t)),
        out_shape=jax.ShapeDtypeStruct((cout_p, L), jnp.float32),
        compiler_params=pltpu.CompilerParams(
            dimension_semantics=("parallel",)),               # megacore-friendly
    )(pre, scale, shift, mask)


def down_forward(x_nchw, params):
    """Equivalent of `down(in_ch, out_ch).forward(x)` with x in NCHW."""
    n, cin, h, w = x_nchw.shape
    assert h % 2 == 0 and w % 2 == 0, "MaxPool2d(2) needs even H, W"
    hp, wp = h // 2, w // 2
    cout = params["w1"].shape[0]
    row_w = wp + 2                                   # padded canvas row width
    ps = (hp + 2) * row_w                            # per-sample canvas size
    ps_r = _round_up(ps, 128)                        # lane-dense per-sample slot
    cin_p = _round_up(cin, 8)                        # f32 sublane packing width
    cout_p = _round_up(cout, 8)
    # canvas length: multiple of both the conv tile and the per-sample slot
    lcm = (TM * ps_r) // math.gcd(TM, ps_r)
    L = _round_up(n * ps_r, lcm)
    m_valid = float(n * hp * wp)                     # BN statistics count

    # Mask of valid (interior, non-padding) canvas lanes.
    pos = jnp.arange(L, dtype=jnp.int32)
    sp = pos % ps_r
    rr = sp // row_w
    cc = sp % row_w
    valid = ((pos < n * ps_r) & (sp < ps) &
             (rr >= 1) & (rr <= hp) & (cc >= 1) & (cc <= wp))
    mask = valid.astype(jnp.float32).reshape(1, L)

    def prep(wt, bias, gamma, beta, cinp):
        co, ci = wt.shape[0], wt.shape[1]
        wpad = jnp.zeros((cout_p, cinp, 3, 3), jnp.float32).at[:co, :ci].set(wt)
        # w3[dx, co, dy*cinp + ci] = W[co, ci, dy, dx]
        w3 = jnp.transpose(wpad, (3, 0, 2, 1)).reshape(3, cout_p, 3 * cinp)
        padv = lambda v, fill: jnp.full((cout_p, 1), fill,
                                        jnp.float32).at[:co, 0].set(v)
        return w3, padv(bias, 0.0), padv(gamma, 1.0), padv(beta, 0.0)

    def fold_bn(s, q, gamma, beta):
        mean = s / m_valid
        var = jnp.maximum(q / m_valid - mean * mean, 0.0)     # biased, clamped
        scale = gamma * jax.lax.rsqrt(var + 1e-5)
        shift = beta - mean * scale
        return scale, shift

    canvas = _pool_to_canvas(x_nchw, cin_p=cin_p, hp=hp, wp=wp, row_w=row_w,
                             ps_r=ps_r, L=L)

    # layer 1
    w3, b, g, bt = prep(params["w1"], params["b1"], params["g1"], params["bt1"],
                        cin_p)
    pre, s, q = _conv_stats(canvas, w3, b, mask, row_w=row_w, tm=TM)
    scale, shift = fold_bn(s, q, g, bt)
    c = _bn_apply(pre, scale, shift, mask, tm=TM)

    # layer 2
    w3, b, g, bt = prep(params["w2"], params["b2"], params["g2"], params["bt2"],
                        cout_p)
    pre, s, q = _conv_stats(c, w3, b, mask, row_w=row_w, tm=TM)
    scale, shift = fold_bn(s, q, g, bt)
    c = _bn_apply(pre, scale, shift, mask, tm=TM)

    # extract NCHW output from the flat canvas
    out = c[:cout, :n * ps_r].reshape(cout, n, ps_r)[:, :, :ps]
    out = out.reshape(cout, n, hp + 2, row_w)[:, :, 1:hp + 1, 1:wp + 1]
    return jnp.transpose(out, (1, 0, 2, 3))


# ------------------------- pure-JAX reference check -------------------------

def down_reference(x, params):
    xp = x.reshape(x.shape[0], x.shape[1], x.shape[2] // 2, 2,
                   x.shape[3] // 2, 2).max(axis=(3, 5))

    def cbr(xx, w, b, g, bt):
        y = jax.lax.conv_general_dilated(
            xx, w, (1, 1), [(1, 1), (1, 1)],
            dimension_numbers=("NCHW", "OIHW", "NCHW"))
        y = y + b[None, :, None, None]
        mu = y.mean(axis=(0, 2, 3), keepdims=True)
        var = ((y - mu) ** 2).mean(axis=(0, 2, 3), keepdims=True)
        y = (y - mu) / jnp.sqrt(var + 1e-5) * g[None, :, None, None] \
            + bt[None, :, None, None]
        return jnp.maximum(y, 0.0)

    xp = cbr(xp, params["w1"], params["b1"], params["g1"], params["bt1"])
    xp = cbr(xp, params["w2"], params["b2"], params["g2"], params["bt2"])
    return xp


# ----------------------------------- main -----------------------------------

if __name__ == "__main__":
    in_ch, out_ch = 4, 8
    N, H, W = 2, 16, 16

    key = jax.random.PRNGKey(0)
    ks = jax.random.split(key, 9)
    x = jax.random.normal(ks[0], (N, in_ch, H, W), dtype=jnp.float32)

    params = {
        "w1": 0.2 * jax.random.normal(ks[1], (out_ch, in_ch, 3, 3), jnp.float32),
        "b1": 0.1 * jax.random.normal(ks[2], (out_ch,), jnp.float32),
        "g1": 1.0 + 0.1 * jax.random.normal(ks[3], (out_ch,), jnp.float32),
        "bt1": 0.1 * jax.random.normal(ks[4], (out_ch,), jnp.float32),
        "w2": 0.2 * jax.random.normal(ks[5], (out_ch, out_ch, 3, 3), jnp.float32),
        "b2": 0.1 * jax.random.normal(ks[6], (out_ch,), jnp.float32),
        "g2": 1.0 + 0.1 * jax.random.normal(ks[7], (out_ch,), jnp.float32),
        "bt2": 0.1 * jax.random.normal(ks[8], (out_ch,), jnp.float32),
    }

    out = jax.block_until_ready(jax.jit(down_forward)(x, params))
    ref = jax.block_until_ready(down_reference(x, params))

    assert out.shape == (N, out_ch, H // 2, W // 2), out.shape
    err = float(jnp.max(jnp.abs(out - ref)))
    assert jnp.allclose(out, ref, atol=1e-4, rtol=1e-4), (
        f"mismatch vs reference: max abs err {err}")

    print("KERNEL_OK")
</pallas_src>

<mosaic_0001>
module attributes {stable_mosaic.version = 11 : i64} {
  func.func @_bn_apply_kernel(%arg0: i32, %arg1: memref<8x512xf32, #tpu.memory_space<vmem>>, %arg2: memref<8x1xf32, #tpu.memory_space<vmem>>, %arg3: memref<8x1xf32, #tpu.memory_space<vmem>>, %arg4: memref<1x512xf32, #tpu.memory_space<vmem>>, %arg5: memref<8x512xf32, #tpu.memory_space<vmem>>) attributes {dimension_semantics = [#tpu.dimension_semantics<parallel>], iteration_bounds = array<i64: 1>, scalar_prefetch = 0 : i64, scratch_operands = 0 : i64, tpu.core_type = #tpu.core_type<tc>, window_params = [{transform_indices = @transform_0, window_bounds = array<i64: 8, 512>}, {pipeline_mode = #tpu.pipeline_mode<synchronous>, transform_indices = @transform_1, window_bounds = array<i64: 8, 1>}, {pipeline_mode = #tpu.pipeline_mode<synchronous>, transform_indices = @transform_2, window_bounds = array<i64: 8, 1>}, {transform_indices = @transform_3, window_bounds = array<i64: 1, 512>}, {transform_indices = @transform_4, window_bounds = array<i64: 8, 512>}]} {
    %c0 = arith.constant 0 : index
    %c0_0 = arith.constant 0 : index
    %0 = vector.load %arg1[%c0, %c0_0] : memref<8x512xf32, #tpu.memory_space<vmem>>, vector<8x512xf32>
    %c0_1 = arith.constant 0 : index
    %c0_2 = arith.constant 0 : index
    %1 = vector.load %arg2[%c0_1, %c0_2] : memref<8x1xf32, #tpu.memory_space<vmem>>, vector<8x1xf32>
    %2 = vector.broadcast %1 : vector<8x1xf32> to vector<8x512xf32>
    %3 = arith.mulf %0, %2 : vector<8x512xf32>
    %c0_3 = arith.constant 0 : index
    %c0_4 = arith.constant 0 : index
    %4 = vector.load %arg3[%c0_3, %c0_4] : memref<8x1xf32, #tpu.memory_space<vmem>>, vector<8x1xf32>
    %5 = vector.broadcast %4 : vector<8x1xf32> to vector<8x512xf32>
    %6 = arith.addf %3, %5 : vector<8x512xf32>
    %cst = arith.constant 0.000000e+00 : f32
    %7 = vector.broadcast %cst : f32 to vector<8x512xf32>
    %8 = arith.maximumf %6, %7 : vector<8x512xf32>
    %c0_5 = arith.constant 0 : index
    %c0_6 = arith.constant 0 : index
    %9 = vector.load %arg4[%c0_5, %c0_6] : memref<1x512xf32, #tpu.memory_space<vmem>>, vector<1x512xf32>
    %cst_7 = arith.constant 5.000000e-01 : f32
    %10 = vector.broadcast %cst_7 : f32 to vector<1x512xf32>
    %11 = arith.cmpf ogt, %9, %10 : vector<1x512xf32>
    %cst_8 = arith.constant 0.000000e+00 : f32
    %12 = vector.shape_cast %11 : vector<1x512xi1> to vector<1x512xi1>
    %13 = vector.broadcast %12 : vector<1x512xi1> to vector<8x512xi1>
    %14 = vector.broadcast %cst_8 : f32 to vector<8x512xf32>
    %15 = arith.select %13, %8, %14 : vector<8x512xi1>, vector<8x512xf32>
    %c0_9 = arith.constant 0 : index
    %c0_10 = arith.constant 0 : index
    %16 = vector.load %arg5[%c0_9, %c0_10] : memref<8x512xf32, #tpu.memory_space<vmem>>, vector<8x512xf32>
    tpu.vector_store %arg5[%c0_9, %c0_10], %15 {strides = array<i32>} : memref<8x512xf32, #tpu.memory_space<vmem>>, vector<8x512xf32>,
    return
  }
  func.func @transform_0(%arg0: i32) -> (i32, i32) {
    %c0_i32 = arith.constant 0 : i32
    %c0_i32_0 = arith.constant 0 : i32
    return %c0_i32, %arg0 : i32, i32
  }
  func.func @transform_1(%arg0: i32) -> (i32, i32) {
    %c0_i32 = arith.constant 0 : i32
    %c0_i32_0 = arith.constant 0 : i32
    %c0_i32_1 = arith.constant 0 : i32
    return %c0_i32, %c0_i32_0 : i32, i32
  }
  func.func @transform_2(%arg0: i32) -> (i32, i32) {
    %c0_i32 = arith.constant 0 : i32
    %c0_i32_0 = arith.constant 0 : i32
    %c0_i32_1 = arith.constant 0 : i32
    return %c0_i32, %c0_i32_0 : i32, i32
  }
  func.func @transform_3(%arg0: i32) -> (i32, i32) {
    %c0_i32 = arith.constant 0 : i32
    %c0_i32_0 = arith.constant 0 : i32
    return %c0_i32, %arg0 : i32, i32
  }
  func.func @transform_4(%arg0: i32) -> (i32, i32) {
    %c0_i32 = arith.constant 0 : i32
    %c0_i32_0 = arith.constant 0 : i32
    return %c0_i32, %arg0 : i32, i32
  }
}

module attributes {stable_mosaic.version = 11 : i64} {
  func.func @_pool_pad_kernel(%arg0: i32, %arg1: memref<1x32x32xf32, #tpu.memory_space<vmem>>, %arg2: memref<16x8xf32, #tpu.memory_space<vmem>>, %arg3: memref<16x8xf32, #tpu.memory_space<vmem>>, %arg4: memref<8x128xf32, #tpu.memory_space<vmem>>) attributes {dimension_semantics = [#tpu.dimension_semantics<parallel>], iteration_bounds = array<i64: 4>, scalar_prefetch = 0 : i64, scratch_operands = 0 : i64, tpu.core_type = #tpu.core_type<tc>, window_params = [{transform_indices = @transform_0, window_bounds = array<i64: 1, 32, 32>}, {pipeline_mode = #tpu.pipeline_mode<synchronous>, transform_indices = @transform_1, window_bounds = array<i64: 16, 8>}, {pipeline_mode = #tpu.pipeline_mode<synchronous>, transform_indices = @transform_2, window_bounds = array<i64: 16, 8>}, {transform_indices = @transform_3, window_bounds = array<i64: 8, 128>}]} {
    %cst = arith.constant 0.000000e+00 : f32
    %0 = vector.broadcast %cst : f32 to vector<8x128xf32>
    %c0 = arith.constant 0 : index
    %c0_0 = arith.constant 0 : index
    %1 = vector.load %arg4[%c0, %c0_0] : memref<8x128xf32, #tpu.memory_space<vmem>>, vector<8x128xf32>
    tpu.vector_store %arg4[%c0, %c0_0], %0 {strides = array<i32>} : memref<8x128xf32, #tpu.memory_space<vmem>>, vector<8x128xf32>,
    %c2_i32 = arith.constant 2 : i32
    %2 = arith.cmpi slt, %arg0, %c2_i32 : i32
    %3 = arith.extui %2 : i1 to i32
    %c0_i32 = arith.constant 0 : i32
    %4 = arith.cmpi ne, %3, %c0_i32 : i32
    scf.if %4 {
      %c0_1 = arith.constant 0 : index
      %c0_2 = arith.constant 0 : index
      %c0_3 = arith.constant 0 : index
      %5 = vector.load %arg1[%c0_1, %c0_2, %c0_3] : memref<1x32x32xf32, #tpu.memory_space<vmem>>, vector<1x32x32xf32>
      %6 = vector.shape_cast %5 : vector<1x32x32xf32> to vector<32x32xf32>
      %7 = vector.extract_strided_slice %6 {offsets = [0, 0], sizes = [32, 16], strides = [1, 1]} : vector<32x32xf32> to vector<32x16xf32>
      %8 = vector.extract_strided_slice %6 {offsets = [0, 16], sizes = [32, 16], strides = [1, 1]} : vector<32x32xf32> to vector<32x16xf32>
      %9 = arith.maximumf %7, %8 : vector<32x16xf32>
      %c0_4 = arith.constant 0 : index
      %c0_5 = arith.constant 0 : index
      %10 = vector.load %arg2[%c0_4, %c0_5] : memref<16x8xf32, #tpu.memory_space<vmem>>, vector<16x8xf32>
      %cst_6 = arith.constant dense<0.000000e+00> : vector<32x8xf32>
      %11 = tpu.matmul %9, %10, %cst_6 {dimension_numbers = #tpu.dot_dimension_numbers<[1], [0], [0], [1], [0, 0, 1, 1], [], []>} : vector<32x16xf32>, vector<16x8xf32>, vector<32x8xf32> -> vector<32x8xf32>
      %c0_7 = arith.constant 0 : index
      %c0_8 = arith.constant 0 : index
      %12 = vector.load %arg3[%c0_7, %c0_8] : memref<16x8xf32, #tpu.memory_space<vmem>>, vector<16x8xf32>
      %cst_9 = arith.constant dense<0.000000e+00> : vector<32x8xf32>
      %13 = tpu.matmul %9, %12, %cst_9 {dimension_numbers = #tpu.dot_dimension_numbers<[1], [0], [0], [1], [0, 0, 1, 1], [], []>} : vector<32x16xf32>, vector<16x8xf32>, vector<32x8xf32> -> vector<32x8xf32>
      %14 = arith.maximumf %11, %13 : vector<32x8xf32>
      %15 = vector.shape_cast %14 : vector<32x8xf32> to vector<4x8x8xf32>
      %16 = vector.extract_strided_slice %15 {offsets = [0, 0, 0], sizes = [4, 1, 8], strides = [1, 1, 1]} : vector<4x8x8xf32> to vector<4x1x8xf32>
      %17 = vector.shape_cast %16 : vector<4x1x8xf32> to vector<4x8xf32>
      %c0_10 = arith.constant 0 : index
      %c11 = arith.constant 11 : index
      %18 = vector.load %arg4[%c0_10, %c11] : memref<8x128xf32, #tpu.memory_space<vmem>>, vector<4x8xf32>
      tpu.vector_store %arg4[%c0_10, %c11], %17 {strides = array<i32>} : memref<8x128xf32, #tpu.memory_space<vmem>>, vector<4x8xf32>,
      %19 = vector.extract_strided_slice %15 {offsets = [0, 1, 0], sizes = [4, 1, 8], strides = [1, 1, 1]} : vector<4x8x8xf32> to vector<4x1x8xf32>
      %20 = vector.shape_cast %19 : vector<4x1x8xf32> to vector<4x8xf32>
      %c0_11 = arith.constant 0 : index
      %c21 = arith.constant 21 : index
      %21 = vector.load %arg4[%c0_11, %c21] : memref<8x128xf32, #tpu.memory_space<vmem>>, vector<4x8xf32>
      tpu.vector_store %arg4[%c0_11, %c21], %20 {strides = array<i32>} : memref<8x128xf32, #tpu.memory_space<vmem>>, vector<4x8xf32>,
      %22 = vector.extract_strided_slice %15 {offsets = [0, 2, 0], sizes = [4, 1, 8], strides = [1, 1, 1]} : vector<4x8x8xf32> to vector<4x1x8xf32>
      %23 = vector.shape_cast %22 : vector<4x1x8xf32> to vector<4x8xf32>
      %c0_12 = arith.constant 0 : index
      %c31 = arith.constant 31 : index
      %24 = vector.load %arg4[%c0_12, %c31] : memref<8x128xf32, #tpu.memory_space<vmem>>, vector<4x8xf32>
      tpu.vector_store %arg4[%c0_12, %c31], %23 {strides = array<i32>} : memref<8x128xf32, #tpu.memory_space<vmem>>, vector<4x8xf32>,
      %25 = vector.extract_strided_slice %15 {offsets = [0, 3, 0], sizes = [4, 1, 8], strides = [1, 1, 1]} : vector<4x8x8xf32> to vector<4x1x8xf32>
      %26 = vector.shape_cast %25 : vector<4x1x8xf32> to vector<4x8xf32>
      %c0_13 = arith.constant 0 : index
      %c41 = arith.constant 41 : index
      %27 = vector.load %arg4[%c0_13, %c41] : memref<8x128xf32, #tpu.memory_space<vmem>>, vector<4x8xf32>
      tpu.vector_store %arg4[%c0_13, %c41], %26 {strides = array<i32>} : memref<8x128xf32, #tpu.memory_space<vmem>>, vector<4x8xf32>,
      %28 = vector.extract_strided_slice %15 {offsets = [0, 4, 0], sizes = [4, 1, 8], strides = [1, 1, 1]} : vector<4x8x8xf32> to vector<4x1x8xf32>
      %29 = vector.shape_cast %28 : vector<4x1x8xf32> to vector<4x8xf32>
      %c0_14 = arith.constant 0 : index
      %c51 = arith.constant 51 : index
      %30 = vector.load %arg4[%c0_14, %c51] : memref<8x128xf32, #tpu.memory_space<vmem>>, vector<4x8xf32>
      tpu.vector_store %arg4[%c0_14, %c51], %29 {strides = array<i32>} : memref<8x128xf32, #tpu.memory_space<vmem>>, vector<4x8xf32>,
      %31 = vector.extract_strided_slice %15 {offsets = [0, 5, 0], sizes = [4, 1, 8], strides = [1, 1, 1]} : vector<4x8x8xf32> to vector<4x1x8xf32>
      %32 = vector.shape_cast %31 : vector<4x1x8xf32> to vector<4x8xf32>
      %c0_15 = arith.constant 0 : index
      %c61 = arith.constant 61 : index
      %33 = vector.load %arg4[%c0_15, %c61] : memref<8x128xf32, #tpu.memory_space<vmem>>, vector<4x8xf32>
      tpu.vector_store %arg4[%c0_15, %c61], %32 {strides = array<i32>} : memref<8x128xf32, #tpu.memory_space<vmem>>, vector<4x8xf32>,
      %34 = vector.extract_strided_slice %15 {offsets = [0, 6, 0], sizes = [4, 1, 8], strides = [1, 1, 1]} : vector<4x8x8xf32> to vector<4x1x8xf32>
      %35 = vector.shape_cast %34 : vector<4x1x8xf32> to vector<4x8xf32>
      %c0_16 = arith.constant 0 : index
      %c71 = arith.constant 71 : index
      %36 = vector.load %arg4[%c0_16, %c71] : memref<8x128xf32, #tpu.memory_space<vmem>>, vector<4x8xf32>
      tpu.vector_store %arg4[%c0_16, %c71], %35 {strides = array<i32>} : memref<8x128xf32, #tpu.memory_space<vmem>>, vector<4x8xf32>,
      %37 = vector.extract_strided_slice %15 {offsets = [0, 7, 0], sizes = [4, 1, 8], strides = [1, 1, 1]} : vector<4x8x8xf32> to vector<4x1x8xf32>
      %38 = vector.shape_cast %37 : vector<4x1x8xf32> to vector<4x8xf32>
      %c0_17 = arith.constant 0 : index
      %c81 = arith.constant 81 : index
      %39 = vector.load %arg4[%c0_17, %c81] : memref<8x128xf32, #tpu.memory_space<vmem>>, vector<4x8xf32>
      tpu.vector_store %arg4[%c0_17, %c81], %38 {strides = array<i32>} : memref<8x128xf32, #tpu.memory_space<vmem>>, vector<4x8xf32>,
    } else {
    }
    return
  }
  func.func @transform_0(%arg0: i32) -> (i32, i32, i32) {
    %c1_i32 = arith.constant 1 : i32
    %0 = arith.minsi %arg0, %c1_i32 : i32
    %c0_i32 = arith.constant 0 : i32
    %c0_i32_0 = arith.constant 0 : i32
    %c0_i32_1 = arith.constant 0 : i32
    return %0, %c0_i32, %c0_i32_0 : i32, i32, i32
  }
  func.func @transform_1(%arg0: i32) -> (i32, i32) {
    %c0_i32 = arith.constant 0 : i32
    %c0_i32_0 = arith.constant 0 : i32
    %c0_i32_1 = arith.constant 0 : i32
    return %c0_i32, %c0_i32_0 : i32, i32
  }
  func.func @transform_2(%arg0: i32) -> (i32, i32) {
    %c0_i32 = arith.constant 0 : i32
    %c0_i32_0 = arith.constant 0 : i32
    %c0_i32_1 = arith.constant 0 : i32
    return %c0_i32, %c0_i32_0 : i32, i32
  }
  func.func @transform_3(%arg0: i32) -> (i32, i32) {
    %c0_i32 = arith.constant 0 : i32
    %c0_i32_0 = arith.constant 0 : i32
    return %c0_i32, %arg0 : i32, i32
  }
}

module attributes {stable_mosaic.version = 11 : i64} {
  func.func @_conv_stats_kernel(%arg0: i32, %arg1: memref<8x128xf32, #tpu.memory_space<vmem>>, %arg2: memref<8x512xf32, #tpu.memory_space<vmem>>, %arg3: memref<8x128xf32, #tpu.memory_space<vmem>>, %arg4: memref<3x8x24xf32, #tpu.memory_space<vmem>>, %arg5: memref<8x1xf32, #tpu.memory_space<vmem>>, %arg6: memref<1x512xf32, #tpu.memory_space<vmem>>, %arg7: memref<8x512xf32, #tpu.memory_space<vmem>>, %arg8: memref<8x1xf32, #tpu.memory_space<vmem>>, %arg9: memref<8x1xf32, #tpu.memory_space<vmem>>, %arg10: memref<8x768xf32, #tpu.memory_space<vmem>>, %arg11: memref<24x514xf32, #tpu.memory_space<vmem>>) attributes {dimension_semantics = [#tpu.dimension_semantics<arbitrary>], iteration_bounds = array<i64: 1>, scalar_prefetch = 0 : i64, scratch_operands = 2 : i64, tpu.core_type = #tpu.core_type<tc>, window_params = [{transform_indices = @transform_0, window_bounds = array<i64: 8, 128>}, {transform_indices = @transform_1, window_bounds = array<i64: 8, 512>}, {transform_indices = @transform_2, window_bounds = array<i64: 8, 128>}, {pipeline_mode = #tpu.pipeline_mode<synchronous>, transform_indices = @transform_3, window_bounds = array<i64: 3, 8, 24>}, {pipeline_mode = #tpu.pipeline_mode<synchronous>, transform_indices = @transform_4, window_bounds = array<i64: 8, 1>}, {transform_indices = @transform_5, window_bounds = array<i64: 1, 512>}, {transform_indices = @transform_6, window_bounds = array<i64: 8, 512>}, {pipeline_mode = #tpu.pipeline_mode<synchronous>, transform_indices = @transform_7, window_bounds = array<i64: 8, 1>}, {pipeline_mode = #tpu.pipeline_mode<synchronous>, transform_indices = @transform_8, window_bounds = array<i64: 8, 1>}]} {
    %c0 = arith.constant 0 : index
    %c0_0 = arith.constant 0 : index
    %0 = vector.load %arg1[%c0, %c0_0] : memref<8x128xf32, #tpu.memory_space<vmem>>, vector<8x128xf32>
    %c0_1 = arith.constant 0 : index
    %c0_2 = arith.constant 0 : index
    %1 = vector.load %arg10[%c0_1, %c0_2] : memref<8x768xf32, #tpu.memory_space<vmem>>, vector<8x128xf32>
    tpu.vector_store %arg10[%c0_1, %c0_2], %0 {strides = array<i32>} : memref<8x768xf32, #tpu.memory_space<vmem>>, vector<8x128xf32>,
    %c0_3 = arith.constant 0 : index
    %c0_4 = arith.constant 0 : index
    %2 = vector.load %arg2[%c0_3, %c0_4] : memref<8x512xf32, #tpu.memory_space<vmem>>, vector<8x512xf32>
    %c0_5 = arith.constant 0 : index
    %c128 = arith.constant 128 : index
    %3 = vector.load %arg10[%c0_5, %c128] : memref<8x768xf32, #tpu.memory_space<vmem>>, vector<8x512xf32>
    tpu.vector_store %arg10[%c0_5, %c128], %2 {strides = array<i32>} : memref<8x768xf32, #tpu.memory_space<vmem>>, vector<8x512xf32>,
    %c0_6 = arith.constant 0 : index
    %c0_7 = arith.constant 0 : index
    %4 = vector.load %arg3[%c0_6, %c0_7] : memref<8x128xf32, #tpu.memory_space<vmem>>, vector<8x128xf32>
    %c0_8 = arith.constant 0 : index
    %c640 = arith.constant 640 : index
    %5 = vector.load %arg10[%c0_8, %c640] : memref<8x768xf32, #tpu.memory_space<vmem>>, vector<8x128xf32>
    tpu.vector_store %arg10[%c0_8, %c640], %4 {strides = array<i32>} : memref<8x768xf32, #tpu.memory_space<vmem>>, vector<8x128xf32>,
    %c0_9 = arith.constant 0 : index
    %c117 = arith.constant 117 : index
    %6 = vector.load %arg10[%c0_9, %c117] : memref<8x768xf32, #tpu.memory_space<vmem>>, vector<8x514xf32>
    %c0_10 = arith.constant 0 : index
    %c0_11 = arith.constant 0 : index
    %7 = vector.load %arg11[%c0_10, %c0_11] : memref<24x514xf32, #tpu.memory_space<vmem>>, vector<8x514xf32>
    tpu.vector_store %arg11[%c0_10, %c0_11], %6 {strides = array<i32>} : memref<24x514xf32, #tpu.memory_space<vmem>>, vector<8x514xf32>,
    %c0_12 = arith.constant 0 : index
    %c127 = arith.constant 127 : index
    %8 = vector.load %arg10[%c0_12, %c127] : memref<8x768xf32, #tpu.memory_space<vmem>>, vector<8x514xf32>
    %c8 = arith.constant 8 : index
    %c0_13 = arith.constant 0 : index
    %9 = vector.load %arg11[%c8, %c0_13] : memref<24x514xf32, #tpu.memory_space<vmem>>, vector<8x514xf32>
    tpu.vector_store %arg11[%c8, %c0_13], %8 {strides = array<i32>} : memref<24x514xf32, #tpu.memory_space<vmem>>, vector<8x514xf32>,
    %c0_14 = arith.constant 0 : index
    %c137 = arith.constant 137 : index
    %10 = vector.load %arg10[%c0_14, %c137] : memref<8x768xf32, #tpu.memory_space<vmem>>, vector<8x514xf32>
    %c16 = arith.constant 16 : index
    %c0_15 = arith.constant 0 : index
    %11 = vector.load %arg11[%c16, %c0_15] : memref<24x514xf32, #tpu.memory_space<vmem>>, vector<8x514xf32>
    tpu.vector_store %arg11[%c16, %c0_15], %10 {strides = array<i32>} : memref<24x514xf32, #tpu.memory_space<vmem>>, vector<8x514xf32>,
    %c0_16 = arith.constant 0 : index
    %c0_17 = arith.constant 0 : index
    %12 = vector.load %arg5[%c0_16, %c0_17] : memref<8x1xf32, #tpu.memory_space<vmem>>, vector<8x1xf32>
    %c0_18 = arith.constant 0 : index
    %c0_19 = arith.constant 0 : index
    %c0_20 = arith.constant 0 : index
    %13 = vector.load %arg4[%c0_18, %c0_19, %c0_20] : memref<3x8x24xf32, #tpu.memory_space<vmem>>, vector<1x8x24xf32>
    %14 = vector.shape_cast %13 : vector<1x8x24xf32> to vector<8x24xf32>
    %c0_21 = arith.constant 0 : index
    %c0_22 = arith.constant 0 : index
    %15 = vector.load %arg11[%c0_21, %c0_22] : memref<24x514xf32, #tpu.memory_space<vmem>>, vector<24x512xf32>
    %cst = arith.constant dense<0.000000e+00> : vector<8x512xf32>
    %16 = tpu.matmul %14, %15, %cst {dimension_numbers = #tpu.dot_dimension_numbers<[1], [0], [0], [1], [0, 0, 1, 1], [], []>} : vector<8x24xf32>, vector<24x512xf32>, vector<8x512xf32> -> vector<8x512xf32>
    %17 = vector.broadcast %12 : vector<8x1xf32> to vector<8x512xf32>
    %18 = arith.addf %17, %16 : vector<8x512xf32>
    %c1 = arith.constant 1 : index
    %c0_23 = arith.constant 0 : index
    %c0_24 = arith.constant 0 : index
    %19 = vector.load %arg4[%c1, %c0_23, %c0_24] : memref<3x8x24xf32, #tpu.memory_space<vmem>>, vector<1x8x24xf32>
    %20 = vector.shape_cast %19 : vector<1x8x24xf32> to vector<8x24xf32>
    %c0_25 = arith.constant 0 : index
    %c1_26 = arith.constant 1 : index
    %21 = vector.load %arg11[%c0_25, %c1_26] : memref<24x514xf32, #tpu.memory_space<vmem>>, vector<24x512xf32>
    %cst_27 = arith.constant dense<0.000000e+00> : vector<8x512xf32>
    %22 = tpu.matmul %20, %21, %cst_27 {dimension_numbers = #tpu.dot_dimension_numbers<[1], [0], [0], [1], [0, 0, 1, 1], [], []>} : vector<8x24xf32>, vector<24x512xf32>, vector<8x512xf32> -> vector<8x512xf32>
    %23 = arith.addf %18, %22 : vector<8x512xf32>
    %c2 = arith.constant 2 : index
    %c0_28 = arith.constant 0 : index
    %c0_29 = arith.constant 0 : index
    %24 = vector.load %arg4[%c2, %c0_28, %c0_29] : memref<3x8x24xf32, #tpu.memory_space<vmem>>, vector<1x8x24xf32>
    %25 = vector.shape_cast %24 : vector<1x8x24xf32> to vector<8x24xf32>
    %c0_30 = arith.constant 0 : index
    %c2_31 = arith.constant 2 : index
    %26 = vector.load %arg11[%c0_30, %c2_31] : memref<24x514xf32, #tpu.memory_space<vmem>>, vector<24x512xf32>
    %cst_32 = arith.constant dense<0.000000e+00> : vector<8x512xf32>
    %27 = tpu.matmul %25, %26, %cst_32 {dimension_numbers = #tpu.dot_dimension_numbers<[1], [0], [0], [1], [0, 0, 1, 1], [], []>} : vector<8x24xf32>, vector<24x512xf32>, vector<8x512xf32> -> vector<8x512xf32>
    %28 = arith.addf %23, %27 : vector<8x512xf32>
    %c0_33 = arith.constant 0 : index
    %c0_34 = arith.constant 0 : index
    %29 = vector.load %arg6[%c0_33, %c0_34] : memref<1x512xf32, #tpu.memory_space<vmem>>, vector<1x512xf32>
    %cst_35 = arith.constant 5.000000e-01 : f32
    %30 = vector.broadcast %cst_35 : f32 to vector<1x512xf32>
    %31 = arith.cmpf ogt, %29, %30 : vector<1x512xf32>
    %cst_36 = arith.constant 0.000000e+00 : f32
    %32 = vector.shape_cast %31 : vector<1x512xi1> to vector<1x512xi1>
    %33 = vector.broadcast %32 : vector<1x512xi1> to vector<8x512xi1>
    %34 = vector.broadcast %cst_36 : f32 to vector<8x512xf32>
    %35 = arith.select %33, %28, %34 : vector<8x512xi1>, vector<8x512xf32>
    %c0_i32 = arith.constant 0 : i32
    %36 = arith.cmpi eq, %arg0, %c0_i32 : i32
    %37 = arith.extui %36 : i1 to i32
    %c0_i32_37 = arith.constant 0 : i32
    %38 = arith.cmpi ne, %37, %c0_i32_37 : i32
    scf.if %38 {
      %cst_50 = arith.constant 0.000000e+00 : f32
      %51 = vector.broadcast %cst_50 : f32 to vector<8x1xf32>
      %c0_51 = arith.constant 0 : index
      %c0_52 = arith.constant 0 : index
      %52 = vector.load %arg8[%c0_51, %c0_52] : memref<8x1xf32, #tpu.memory_space<vmem>>, vector<8x1xf32>
      tpu.vector_store %arg8[%c0_51, %c0_52], %51 {strides = array<i32>} : memref<8x1xf32, #tpu.memory_space<vmem>>, vector<8x1xf32>,
      %cst_53 = arith.constant 0.000000e+00 : f32
      %53 = vector.broadcast %cst_53 : f32 to vector<8x1xf32>
      %c0_54 = arith.constant 0 : index
      %c0_55 = arith.constant 0 : index
      %54 = vector.load %arg9[%c0_54, %c0_55] : memref<8x1xf32, #tpu.memory_space<vmem>>, vector<8x1xf32>
      tpu.vector_store %arg9[%c0_54, %c0_55], %53 {strides = array<i32>} : memref<8x1xf32, #tpu.memory_space<vmem>>, vector<8x1xf32>,
    } else {
    }
    %c0_38 = arith.constant 0 : index
    %c0_39 = arith.constant 0 : index
    %39 = vector.load %arg8[%c0_38, %c0_39] : memref<8x1xf32, #tpu.memory_space<vmem>>, vector<8x1xf32>
    %cst_40 = arith.constant dense<0.000000e+00> : vector<8xf32>
    %40 = vector.multi_reduction <add>, %35, %cst_40 [1] : vector<8x512xf32> to vector<8xf32>
    %41 = vector.shape_cast %40 : vector<8xf32> to vector<8x1xf32>
    %42 = arith.addf %39, %41 : vector<8x1xf32>
    %c0_41 = arith.constant 0 : index
    %c0_42 = arith.constant 0 : index
    %43 = vector.load %arg8[%c0_41, %c0_42] : memref<8x1xf32, #tpu.memory_space<vmem>>, vector<8x1xf32>
    tpu.vector_store %arg8[%c0_41, %c0_42], %42 {strides = array<i32>} : memref<8x1xf32, #tpu.memory_space<vmem>>, vector<8x1xf32>,
    %c0_43 = arith.constant 0 : index
    %c0_44 = arith.constant 0 : index
    %44 = vector.load %arg9[%c0_43, %c0_44] : memref<8x1xf32, #tpu.memory_space<vmem>>, vector<8x1xf32>
    %45 = arith.mulf %35, %35 : vector<8x512xf32>
    %cst_45 = arith.constant dense<0.000000e+00> : vector<8xf32>
    %46 = vector.multi_reduction <add>, %45, %cst_45 [1] : vector<8x512xf32> to vector<8xf32>
    %47 = vector.shape_cast %46 : vector<8xf32> to vector<8x1xf32>
    %48 = arith.addf %44, %47 : vector<8x1xf32>
    %c0_46 = arith.constant 0 : index
    %c0_47 = arith.constant 0 : index
    %49 = vector.load %arg9[%c0_46, %c0_47] : memref<8x1xf32, #tpu.memory_space<vmem>>, vector<8x1xf32>
    tpu.vector_store %arg9[%c0_46, %c0_47], %48 {strides = array<i32>} : memref<8x1xf32, #tpu.memory_space<vmem>>, vector<8x1xf32>,
    %c0_48 = arith.constant 0 : index
    %c0_49 = arith.constant 0 : index
    %50 = vector.load %arg7[%c0_48, %c0_49] : memref<8x512xf32, #tpu.memory_space<vmem>>, vector<8x512xf32>
    tpu.vector_store %arg7[%c0_48, %c0_49], %35 {strides = array<i32>} : memref<8x512xf32, #tpu.memory_space<vmem>>, vector<8x512xf32>,
    return
  }
  func.func @transform_0(%arg0: i32) -> (i32, i32) {
    %c4_i32 = arith.constant 4 : i32
    %0 = arith.muli %arg0, %c4_i32 : i32
    %c1_i32 = arith.constant 1 : i32
    %1 = arith.subi %0, %c1_i32 : i32
    %c0_i32 = arith.constant 0 : i32
    %2 = arith.maxsi %1, %c0_i32 : i32
    %c0_i32_0 = arith.constant 0 : i32
    %c0_i32_1 = arith.constant 0 : i32
    return %c0_i32_0, %2 : i32, i32
  }
  func.func @transform_1(%arg0: i32) -> (i32, i32) {
    %c0_i32 = arith.constant 0 : i32
    %c0_i32_0 = arith.constant 0 : i32
    return %c0_i32, %arg0 : i32, i32
  }
  func.func @transform_2(%arg0: i32) -> (i32, i32) {
    %c1_i32 = arith.constant 1 : i32
    %0 = arith.addi %arg0, %c1_i32 : i32
    %c4_i32 = arith.constant 4 : i32
    %1 = arith.muli %0, %c4_i32 : i32
    %c3_i32 = arith.constant 3 : i32
    %2 = arith.minsi %1, %c3_i32 : i32
    %c0_i32 = arith.constant 0 : i32
    %c0_i32_0 = arith.constant 0 : i32
    return %c0_i32, %2 : i32, i32
  }
  func.func @transform_3(%arg0: i32) -> (i32, i32, i32) {
    %c0_i32 = arith.constant 0 : i32
    %c0_i32_0 = arith.constant 0 : i32
    %c0_i32_1 = arith.constant 0 : i32
    %c0_i32_2 = arith.constant 0 : i32
    return %c0_i32, %c0_i32_0, %c0_i32_1 : i32, i32, i32
  }
  func.func @transform_4(%arg0: i32) -> (i32, i32) {
    %c0_i32 = arith.constant 0 : i32
    %c0_i32_0 = arith.constant 0 : i32
    %c0_i32_1 = arith.constant 0 : i32
    return %c0_i32, %c0_i32_0 : i32, i32
  }
  func.func @transform_5(%arg0: i32) -> (i32, i32) {
    %c0_i32 = arith.constant 0 : i32
    %c0_i32_0 = arith.constant 0 : i32
    return %c0_i32, %arg0 : i32, i32
  }
  func.func @transform_6(%arg0: i32) -> (i32, i32) {
    %c0_i32 = arith.constant 0 : i32
    %c0_i32_0 = arith.constant 0 : i32
    return %c0_i32, %arg0 : i32, i32
  }
  func.func @transform_7(%arg0: i32) -> (i32, i32) {
    %c0_i32 = arith.constant 0 : i32
    %c0_i32_0 = arith.constant 0 : i32
    %c0_i32_1 = arith.constant 0 : i32
    return %c0_i32, %c0_i32_0 : i32, i32
  }
  func.func @transform_8(%arg0: i32) -> (i32, i32) {
    %c0_i32 = arith.constant 0 : i32
    %c0_i32_0 = arith.constant 0 : i32
    %c0_i32_1 = arith.constant 0 : i32
    return %c0_i32, %c0_i32_0 : i32, i32
  }
}

</mosaic_0001>

<llo_original>
// kernel: down_forward.7
$region0: #{down_forward.7}
  #allocation0 [shape = 'u32[]', space=smem, size = 0x4, offset = 0x4, fixed_abs, tag = 'smem constant byte address 0x4 - core index']
  #allocation1 [shape = 'u32[144,128]{1,0:T(1,128)}', space=vmem, size = 0x12000, scoped, tag = 'internal scratch']
  %s0 = inlined_call_operand.vmem [shape: f32[8,512], index: 0, kind: input, shape index: {}]
  %s1 = inlined_call_operand.vmem [shape: f32[8,1], index: 1, kind: input, shape index: {}]
  %s2 = inlined_call_operand.vmem [shape: f32[8,1], index: 2, kind: input, shape index: {}]
  %s3 = inlined_call_operand.vmem [shape: f32[1,512], index: 3, kind: input, shape index: {}]
  %s4 = inlined_call_operand.vmem [shape: f32[8,512], index: 4, kind: output, shape index: {}]
  %s5 = sld [smem:[#allocation0]]
  $region26: #{down_forward.7} parent=0
    _
  %s7 = ssub.s32 1, %s5
  %s8 = scalar_select 0, %s7, %s5
  // Predicated region
  $region2: #{down_forward.7} parent=0 // pred_check
    _
  $region3: #{down_forward.7} parent=0 // pred_check_branch
    %10 = sbr.rel (0) target = $region5
  $region4: #{down_forward.7} parent=0 // pred_region
    _
  $region5: #{down_forward.7} parent=0 // pred_fallthru
    _
  // Predicated region
  $region6: #{down_forward.7} parent=0 // pred_check
    _
  $region7: #{down_forward.7} parent=0 // pred_check_branch
    %12 = sbr.rel (0) target = $region9
  $region8: #{down_forward.7} parent=0 // pred_region
    _
  $region9: #{down_forward.7} parent=0 // pred_fallthru
    _
  // Predicated region
  $region10: #{down_forward.7} parent=0 // pred_check
    _
  $region11: #{down_forward.7} parent=0 // pred_check_branch
    %14 = sbr.rel (0) target = $region13
  $region12: #{down_forward.7} parent=0 // pred_region
    _
  $region13: #{down_forward.7} parent=0 // pred_fallthru
    _
  // Predicated region
  $region14: #{down_forward.7} parent=0 // pred_check
    _
  $region15: #{down_forward.7} parent=0 // pred_check_branch
    %16 = sbr.rel (0) target = $region17
  $region16: #{down_forward.7} parent=0 // pred_region
    _
  $region17: #{down_forward.7} parent=0 // pred_fallthru
    _
  %v17 = vld [vmem:[%s0] sm:$0xff]
  %v18 = vld [vmem:[%s0 + $0x8] sm:$0xff]
  %v19 = vld [vmem:[%s0 + $0x10] sm:$0xff]
  %v20 = vld [vmem:[%s0 + $0x18] sm:$0xff]
  %v21 = vld [vmem:[%s1] sm:$0xff]
  %23 = vset.pattern.permute.xlu0 0
  %24 = vperm.xlu0 %23, %v21
  %v25 = vpop.permute.xlu0 %24
  %v27 = vmul.f32 %v17, %v25
  %v28 = vmul.f32 %v18, %v25
  %v29 = vmul.f32 %v19, %v25
  %v30 = vmul.f32 %v20, %v25
  %v31 = vld [vmem:[%s2] sm:$0xff]
  %33 = vset.pattern.permute.xlu0 0
  %34 = vperm.xlu0 %33, %v31
  %v35 = vpop.permute.xlu0 %34
  %v37 = vadd.f32 %v27, %v35
  %v38 = vadd.f32 %v28, %v35
  %v39 = vadd.f32 %v29, %v35
  %v40 = vadd.f32 %v30, %v35
  %v41 = vmax.f32 %v37, 0.0
  %v42 = vmax.f32 %v38, 0.0
  %v43 = vmax.f32 %v39, 0.0
  %v44 = vmax.f32 %v40, 0.0
  %v45 = vld [vmem:[%s3] sm:$0xf]
  %vm46 = vcmp.gt.f32.partialorder %v45, 0.5
  %v47 = vsel %vm46, 1, 0
  %v48 = vlaneseq
  %v49 = vshrl.u32 %v48, 7
  %v50 = vsub.s32 0, %v49
  %v51 = vrot.slane %v47, %v50
  %v52 = vlaneseq
  %v53 = vshrl.u32 %v52, 7
  %v54 = vsub.s32 1, %v53
  %v55 = vrot.slane %v47, %v54
  %v56 = vlaneseq
  %v57 = vshrl.u32 %v56, 7
  %v58 = vsub.s32 2, %v57
  %v59 = vrot.slane %v47, %v58
  %v60 = vlaneseq
  %v61 = vshrl.u32 %v60, 7
  %v62 = vsub.s32 3, %v61
  %v63 = vrot.slane %v47, %v62
  %vm64 = vcmp.eq.s32.totalorder %v51, 1
  %vm65 = vcmp.eq.s32.totalorder %v55, 1
  %vm66 = vcmp.eq.s32.totalorder %v59, 1
  %vm67 = vcmp.eq.s32.totalorder %v63, 1
  %v68 = vsel %vm64, %v41, 0.0
  %v69 = vsel %vm65, %v42, 0.0
  %v70 = vsel %vm66, %v43, 0.0
  %v71 = vsel %vm67, %v44, 0.0
  %72 = vst [vmem:[%s4] sm:$0xff] %v68
  %73 = vst [vmem:[%s4 + $0x8] sm:$0xff] %v69
  %74 = vst [vmem:[%s4 + $0x10] sm:$0xff] %v70
  %75 = vst [vmem:[%s4 + $0x18] sm:$0xff] %v71
  // Predicated region
  $region18: #{down_forward.7} parent=0 // pred_check
    _
  $region19: #{down_forward.7} parent=0 // pred_check_branch
    %77 = sbr.rel (0) target = $region21
  $region20: #{down_forward.7} parent=0 // pred_region
    _
  $region21: #{down_forward.7} parent=0 // pred_fallthru
    _
  // Predicated region
  $region22: #{down_forward.7} parent=0 // pred_check
    _
  $region23: #{down_forward.7} parent=0 // pred_check_branch
    %79 = sbr.rel (0) target = $region25
  $region24: #{down_forward.7} parent=0 // pred_region
    _
  $region25: #{down_forward.7} parent=0 // pred_fallthru
    _

// kernel: down_forward.5
$region0: #{down_forward.5}
  #allocation0 [shape = 'u32[]', space=smem, size = 0x4, offset = 0x4, fixed_abs, tag = 'smem constant byte address 0x4 - core index']
  #allocation1 [shape = 'u32[144,128]{1,0:T(1,128)}', space=vmem, size = 0x12000, scoped, tag = 'internal scratch']
  %s0 = inlined_call_operand.vmem [shape: f32[2,32,32], index: 0, kind: input, shape index: {}]
  %s1 = inlined_call_operand.vmem [shape: f32[16,8], index: 1, kind: input, shape index: {}]
  %s2 = inlined_call_operand.vmem [shape: f32[16,8], index: 2, kind: input, shape index: {}]
  %s3 = inlined_call_operand.vmem [shape: f32[8,512], index: 3, kind: output, shape index: {}]
  %s4 = sld [smem:[#allocation0]]
  $region49: #{down_forward.5} parent=0
    _
  %s6 = ssub.s32 1, %s4
  %s7 = scalar_select 0, %s6, %s4
  loop: start=0, step=1, limit=6
  $region2: #{down_forward.5} parent=0 // loop_pre_header
    _
  $region3: #{down_forward.5} parent=0 // loop_header
    %s9 = sphi 0, %s13
    %p10 = scmp.ge.s32.totalorder %s9, 6
    %s23 = sphi 0, %s25
    %s26 = sphi 0, %s23
    %s27 = sphi 0, %s26
    %s43 = sphi 0, %s27
    %s47 = sphi 0, %s47
    %s49 = sphi 0, %s47
    %s50 = sphi 0, %s49
    %s64 = sphi 0, %s50
    %s68 = sphi 0, %s68
    %s70 = sphi 0, %s68
    %s71 = sphi 0, %s70
    %s85 = sphi 0, %s71
    %s91 = sphi 0, %s93
    %s94 = sphi 0, %s91
    %s95 = sphi 0, %s94
    %s111 = sphi 0, %s95
  $region4: #{down_forward.5} parent=0 // loop_header_branch
    %12 = sbr.rel (%p10) target = $region8
  $region5: #{down_forward.5} parent=0 // loop_body
    %s14 = ssub.s32 %s9, 1
    %s15 = ssub.s32 %s9, 2
    %s16 = sadd.s32 %s9, 1
    %p17 = scmp.lt.s32.totalorder %s9, 1
    %s18 = scalar_select %p17, %s9, 1
    %p19 = scmp.lt.s32.totalorder %s16, 1
    %s20 = scalar_select %p19, %s16, 1
    %s21 = ssub.s32 %s18, %s20
    %p22 = scmp.eq.s32.totalorder %s21, 0
    %s24 = sadd.s32 %s23, 1
    %s25 = scalar_select %p22, %s23, %s24
    %p28 = pneg %p22
    %p29 = scmp.eq.s32.totalorder %s9, 3
    %p30 = por %p28, %p29
    %p31 = scmp.ne.s32.totalorder %s23, %s26
    %p32 = scmp.eq.s32.totalorder %s9, 0
    %p33 = por %p31, %p32
    %p34 = scmp.ne.s32.totalorder %s23, %s26
    %p35 = scmp.eq.s32.totalorder %s14, 3
    %p36 = por %p34, %p35
    %p37 = scmp.ne.s32.totalorder %s26, %s27
    %p38 = scmp.eq.s32.totalorder %s14, 0
    %p39 = por %p37, %p38
    %p40 = scmp.ne.s32.totalorder %s26, %s27
    %p41 = scmp.eq.s32.totalorder %s15, 3
    %p42 = por %p40, %p41
    %p44 = scmp.ne.s32.totalorder %s27, %s43
    %p45 = scmp.eq.s32.totalorder %s15, 0
    %p46 = por %p44, %p45
    %s48 = sadd.s32 %s47, 1
    %p51 = scmp.eq.s32.totalorder %s9, 3
    %p52 = scmp.ne.s32.totalorder %s47, %s49
    %p53 = scmp.eq.s32.totalorder %s9, 0
    %p54 = por %p52, %p53
    %p55 = scmp.ne.s32.totalorder %s47, %s49
    %p56 = scmp.eq.s32.totalorder %s14, 3
    %p57 = por %p55, %p56
    %p58 = scmp.ne.s32.totalorder %s49, %s50
    %p59 = scmp.eq.s32.totalorder %s14, 0
    %p60 = por %p58, %p59
    %p61 = scmp.ne.s32.totalorder %s49, %s50
    %p62 = scmp.eq.s32.totalorder %s15, 3
    %p63 = por %p61, %p62
    %p65 = scmp.ne.s32.totalorder %s50, %s64
    %p66 = scmp.eq.s32.totalorder %s15, 0
    %p67 = por %p65, %p66
    %s69 = sadd.s32 %s68, 1
    %p72 = scmp.eq.s32.totalorder %s9, 3
    %p73 = scmp.ne.s32.totalorder %s68, %s70
    %p74 = scmp.eq.s32.totalorder %s9, 0
    %p75 = por %p73, %p74
    %p76 = scmp.ne.s32.totalorder %s68, %s70
    %p77 = scmp.eq.s32.totalorder %s14, 3
    %p78 = por %p76, %p77
    %p79 = scmp.ne.s32.totalorder %s70, %s71
    %p80 = scmp.eq.s32.totalorder %s14, 0
    %p81 = por %p79, %p80
    %p82 = scmp.ne.s32.totalorder %s70, %s71
    %p83 = scmp.eq.s32.totalorder %s15, 3
    %p84 = por %p82, %p83
    %p86 = scmp.ne.s32.totalorder %s71, %s85
    %p87 = scmp.eq.s32.totalorder %s15, 0
    %p88 = por %p86, %p87
    %s89 = ssub.s32 %s9, %s16
    %p90 = scmp.eq.s32.totalorder %s89, 0
    %s92 = sadd.s32 %s91, 1
    %s93 = scalar_select %p90, %s91, %s92
    %p96 = pneg %p90
    %p97 = scmp.eq.s32.totalorder %s9, 3
    %p98 = por %p96, %p97
    %p99 = scmp.ne.s32.totalorder %s91, %s94
    %p100 = scmp.eq.s32.totalorder %s9, 0
    %p101 = por %p99, %p100
    %p102 = scmp.ne.s32.totalorder %s91, %s94
    %p103 = scmp.eq.s32.totalorder %s14, 3
    %p104 = por %p102, %p103
    %p105 = scmp.ne.s32.totalorder %s94, %s95
    %p106 = scmp.eq.s32.totalorder %s14, 0
    %p107 = por %p105, %p106
    %p108 = scmp.ne.s32.totalorder %s94, %s95
    %p109 = scmp.eq.s32.totalorder %s15, 3
    %p110 = por %p108, %p109
    %p112 = scmp.ne.s32.totalorder %s95, %s111
    %p113 = scmp.eq.s32.totalorder %s15, 0
    %p114 = por %p112, %p113
    %p115 = scmp.le.s32.totalorder 1, %s9
    %p116 = scmp.lt.s32.totalorder %s9, 5
    %p117 = pnand %p115, %p116
    %p118 = pneg %p117
    // Predicated region
    $region9: #{down_forward.5} parent=5 // pred_check
      _
    $region10: #{down_forward.5} parent=5 // pred_check_branch
      %120 = sbr.rel (%p117) target = $region12
    $region11: #{down_forward.5} parent=5 // pred_region
      %s121 = ssub.s32 %s9, 1
      // Predicated region
      $region13: #{down_forward.5} parent=11 // pred_check
        %p122 = pneg %p60
      $region14: #{down_forward.5} parent=11 // pred_check_branch
        %124 = sbr.rel (%p122) target = $region16
      $region15: #{down_forward.5} parent=11 // pred_region
        _
      $region16: #{down_forward.5} parent=11 // pred_fallthru
        _
      // Predicated region
      $region17: #{down_forward.5} parent=11 // pred_check
        %p125 = pneg %p81
      $region18: #{down_forward.5} parent=11 // pred_check_branch
        %127 = sbr.rel (%p125) target = $region20
      $region19: #{down_forward.5} parent=11 // pred_region
        _
      $region20: #{down_forward.5} parent=11 // pred_fallthru
        _
    $region12: #{down_forward.5} parent=5 // pred_fallthru
      _
    %p128 = scmp.lt.s32.totalorder %s9, 4
    // Predicated region
    $region21: #{down_forward.5} parent=5 // pred_check
      %p129 = pneg %p128
    $region22: #{down_forward.5} parent=5 // pred_check_branch
      %131 = sbr.rel (%p129) target = $region24
    $region23: #{down_forward.5} parent=5 // pred_region
      // Predicated region
      $region25: #{down_forward.5} parent=23 // pred_check
        %p132 = pneg %p33
      $region26: #{down_forward.5} parent=23 // pred_check_branch
        %134 = sbr.rel (%p132) target = $region28
      $region27: #{down_forward.5} parent=23 // pred_region
        %p135 = scmp.lt.s32.totalorder %s9, 1
        %s136 = scalar_select %p135, %s9, 1
        %p137 = scmp.lt.s32.totalorder %s136, 1
        %s138 = scalar_select %p137, %s136, 1
        %s139 = smul.addr %s138, 4
        %s140 = smul.addr %s139, 8
        %s141 = scalar_lea.vmem %s0, %s140
        %p142 = scmp.lt.s32.totalorder %s9, 1
        %s143 = scalar_select %p142, %s9, 1
      $region28: #{down_forward.5} parent=23 // pred_fallthru
        _
    $region24: #{down_forward.5} parent=5 // pred_fallthru
      _
    %p144 = scmp.le.s32.totalorder 1, %s9
    %p145 = scmp.lt.s32.totalorder %s9, 5
    %p146 = pnand %p144, %p145
    %p147 = pneg %p146
    // Predicated region
    $region29: #{down_forward.5} parent=5 // pred_check
      _
    $region30: #{down_forward.5} parent=5 // pred_check_branch
      %149 = sbr.rel (%p146) target = $region32
    $region31: #{down_forward.5} parent=5 // pred_region
      %s150 = ssub.s32 %s9, 1
      %p151 = scmp.lt.s32.totalorder %s14, 1
      %s152 = scalar_select %p151, %s14, 1
      %p153 = scmp.lt.s32.totalorder %s152, 1
      %s154 = scalar_select %p153, %s152, 1
      %s155 = smul.addr %s154, 4
      %s156 = smul.addr %s155, 8
      %s157 = scalar_lea.vmem %s0, %s156
      %p158 = pneg %p39
      %p159 = pneg %p36
      %p160 = pneg %p60
      %p161 = pneg %p57
      %p162 = pneg %p81
      %p163 = pneg %p78
      %p164 = pneg %p107
      %p165 = pneg %p104
      %p166 = scmp.lt.s32.totalorder %s14, 3
      %s167 = scalar_select %p166, %s14, 3
      %s168 = smul.addr %s167, 8
      %s169 = scalar_lea.vmem %s3, %s168
      %p170 = scmp.lt.s32.totalorder %s14, 1
      %s171 = scalar_select %p170, %s14, 1
      %p172 = scmp.lt.s32.totalorder %s171, 1
      %s173 = scalar_select %p172, %s171, 1
      %s174 = smul.addr %s173, 4
      %s175 = smul.addr %s174, 8
      %s176 = scalar_lea.vmem %s0, %s175
      %p177 = scmp.lt.s32.totalorder %s14, 1
      %s178 = scalar_select %p177, %s14, 1
      %p179 = scmp.lt.s32.totalorder %s14, 3
      %s180 = scalar_select %p179, %s14, 3
      %s181 = smul.addr %s180, 8
      %s182 = scalar_lea.vmem %s3, %s181
      %183 = vst [vmem:[%s182] sm:$0xff] 0.0
      %p184 = scmp.lt.s32.totalorder %s14, 2
      // Predicated region
      $region33: #{down_forward.5} parent=31 // pred_check
        %p185 = pneg %p184
      $region34: #{down_forward.5} parent=31 // pred_check_branch
        %187 = sbr.rel (%p185) target = $region36
      $region35: #{down_forward.5} parent=31 // pred_region
        %v188 = vld [vmem:[%s176] sm:$0xff]
        %v189 = vld [vmem:[%s176 + $0x8] sm:$0xff]
        %v190 = vld [vmem:[%s176 + $0x10] sm:$0xff]
        %v191 = vld [vmem:[%s176 + $0x18] sm:$0xff]
        %196 = vrot.lane.b32.xlu0 %v188, 112
        %v197 = vpop.permute.xlu0 %196
        %198 = vrot.lane.b32.xlu0 %v189, 112
        %v199 = vpop.permute.xlu0 %198
        %200 = vrot.lane.b32.xlu0 %v190, 112
        %v201 = vpop.permute.xlu0 %200
        %202 = vrot.lane.b32.xlu0 %v191, 112
        %v203 = vpop.permute.xlu0 %202
        %v208 = vmax.f32 %v188, %v197
        %v209 = vmax.f32 %v189, %v199
        %v210 = vmax.f32 %v190, %v201
        %v211 = vmax.f32 %v191, %v203
        %v212 = vld [vmem:[%s1] sm:$0xff]
        %v213 = vld [vmem:[%s1 + $0x8] sm:$0xff]
        %vm214 = vcmask 130048
        %v216 = vsel %vm214, %v208, 0
        %v219 = vsel %vm214, %v209, 0
        %v222 = vsel %vm214, %v210, 0
        %v225 = vsel %vm214, %v211, 0
        %227 = vmatprep.subr.mxu0 0.0
        %228 = vmatpush1.msra.mxu0 %v212
        %229 = vmatprep.subr.mxu0 0.0
        %230 = vmatpush1.msra.mxu0 %v213
        %231 = vmatprep.subr.mxu0 0.0
        %232 = vmatpush1.msra.mxu0 0.0
        %233 = vmatprep.subr.mxu0 0.0
        %234 = vmatpush1.msra.mxu0 0.0
        %235 = vmatprep.subr.mxu0 0.0
        %236 = vmatpush1.msra.mxu0 0.0
        %237 = vmatprep.subr.mxu0 0.0
        %238 = vmatpush1.msra.mxu0 0.0
        %239 = vmatprep.subr.mxu0 0.0
        %240 = vmatpush1.msra.mxu0 0.0
        %241 = vmatprep.subr.mxu0 0.0
        %242 = vmatpush1.msra.mxu0 0.0
        %243 = vmatprep.subr.mxu0 0.0
        %244 = vmatpush1.msra.mxu0 0.0
        %245 = vmatprep.subr.mxu0 0.0
        %246 = vmatpush1.msra.mxu0 0.0
        %247 = vmatprep.subr.mxu0 0.0
        %248 = vmatpush1.msra.mxu0 0.0
        %249 = vmatprep.subr.mxu0 0.0
        %250 = vmatpush1.msra.mxu0 0.0
        %251 = vmatprep.subr.mxu0 0.0
        %252 = vmatpush1.msra.mxu0 0.0
        %253 = vmatprep.subr.mxu0 0.0
        %254 = vmatpush1.msra.mxu0 0.0
        %255 = vmatprep.subr.mxu0 0.0
        %256 = vmatpush1.msra.mxu0 0.0
        %257 = vmatprep.subr.mxu0 0.0
        %258 = vmatpush1.msra.mxu0 0.0
        %259 = vmatprep.subr.mxu0 0.0
        %260 = vmatpush1.msra.mxu0 0.0
        %261 = vmatprep.subr.mxu0 0.0
        %262 = vmatpush1.msra.mxu0 0.0
        %263 = vmatprep.subr.mxu0 0.0
        %264 = vmatpush1.msra.mxu0 0.0
        %265 = vmatprep.subr.mxu0 0.0
        %266 = vmatpush1.msra.mxu0 0.0
        %267 = vmatprep.subr.mxu0 0.0
        %268 = vmatpush1.msra.mxu0 0.0
        %269 = vmatprep.subr.mxu0 0.0
        %270 = vmatpush1.msra.mxu0 0.0
        %271 = vmatprep.subr.mxu0 0.0
        %272 = vmatpush1.msra.mxu0 0.0
        %273 = vmatprep.subr.mxu0 0.0
        %274 = vmatpush1.msra.mxu0 0.0
        %275 = vmatprep.subr.mxu0 0.0
        %276 = vmatpush1.msra.mxu0 0.0
        %277 = vmatprep.subr.mxu0 0.0
        %278 = vmatpush1.msra.mxu0 0.0
        %279 = vmatprep.subr.mxu0 0.0
        %280 = vmatpush1.msra.mxu0 0.0
        %281 = vmatprep.subr.mxu0 0.0
        %282 = vmatpush1.msra.mxu0 0.0
        %283 = vmatprep.subr.mxu0 0.0
        %284 = vmatpush1.msra.mxu0 0.0
        %285 = vmatprep.subr.mxu0 0.0
        %286 = vmatpush1.msra.mxu0 0.0
        %287 = vmatprep.subr.mxu0 0.0
        %288 = vmatpush1.msra.mxu0 0.0
        %289 = vmatprep.subr.mxu0 0.0
        %290 = vmatpush1.msra.mxu0 0.0
        %291 = vmatprep.mubr.f32.mxu0 0.0
        %292 = vmatmul.mubr.f32.gmra.mrb[0].mxu0 %v216
        %v293 = vpop.f32.mrb[0].mxu0
        %v294 = vadd.f32 0.0, %v293
        %v295 = vpop.f32.mrb[0].mxu0
        %296 = vmatprep.mubr.f32.mxu0 0.0
        %297 = vmatmul.mubr.f32.gmra.mrb[0].mxu0 %v219
        %v298 = vpop.f32.mrb[0].mxu0
        %v299 = vadd.f32 0.0, %v298
        %v300 = vpop.f32.mrb[0].mxu0
        %301 = vmatprep.mubr.f32.mxu0 0.0
        %302 = vmatmul.mubr.f32.gmra.mrb[0].mxu0 %v222
        %v303 = vpop.f32.mrb[0].mxu0
        %v304 = vadd.f32 0.0, %v303
        %v305 = vpop.f32.mrb[0].mxu0
        %306 = vmatprep.mubr.f32.mxu0 0.0
        %307 = vmatmul.mubr.f32.gmra.mrb[0].mxu0 %v225
        %v308 = vpop.f32.mrb[0].mxu0
        %v309 = vadd.f32 0.0, %v308
        %v310 = vpop.f32.mrb[0].mxu0
        %311 = vdwg.mxu0
        %v312 = vld [vmem:[%s2] sm:$0xff]
        %v313 = vld [vmem:[%s2 + $0x8] sm:$0xff]
        %314 = vmatprep.subr.mxu0 0.0
        %315 = vmatpush1.msra.mxu0 %v312
        %316 = vmatprep.subr.mxu0 0.0
        %317 = vmatpush1.msra.mxu0 %v313
        %318 = vmatprep.subr.mxu0 0.0
        %319 = vmatpush1.msra.mxu0 0.0
        %320 = vmatprep.subr.mxu0 0.0
        %321 = vmatpush1.msra.mxu0 0.0
        %322 = vmatprep.subr.mxu0 0.0
        %323 = vmatpush1.msra.mxu0 0.0
        %324 = vmatprep.subr.mxu0 0.0
        %325 = vmatpush1.msra.mxu0 0.0
        %326 = vmatprep.subr.mxu0 0.0
        %327 = vmatpush1.msra.mxu0 0.0
        %328 = vmatprep.subr.mxu0 0.0
        %329 = vmatpush1.msra.mxu0 0.0
        %330 = vmatprep.subr.mxu0 0.0
        %331 = vmatpush1.msra.mxu0 0.0
        %332 = vmatprep.subr.mxu0 0.0
        %333 = vmatpush1.msra.mxu0 0.0
        %334 = vmatprep.subr.mxu0 0.0
        %335 = vmatpush1.msra.mxu0 0.0
        %336 = vmatprep.subr.mxu0 0.0
        %337 = vmatpush1.msra.mxu0 0.0
        %338 = vmatprep.subr.mxu0 0.0
        %339 = vmatpush1.msra.mxu0 0.0
        %340 = vmatprep.subr.mxu0 0.0
        %341 = vmatpush1.msra.mxu0 0.0
        %342 = vmatprep.subr.mxu0 0.0
        %343 = vmatpush1.msra.mxu0 0.0
        %344 = vmatprep.subr.mxu0 0.0
        %345 = vmatpush1.msra.mxu0 0.0
        %346 = vmatprep.subr.mxu0 0.0
        %347 = vmatpush1.msra.mxu0 0.0
        %348 = vmatprep.subr.mxu0 0.0
        %349 = vmatpush1.msra.mxu0 0.0
        %350 = vmatprep.subr.mxu0 0.0
        %351 = vmatpush1.msra.mxu0 0.0
        %352 = vmatprep.subr.mxu0 0.0
        %353 = vmatpush1.msra.mxu0 0.0
        %354 = vmatprep.subr.mxu0 0.0
        %355 = vmatpush1.msra.mxu0 0.0
        %356 = vmatprep.subr.mxu0 0.0
        %357 = vmatpush1.msra.mxu0 0.0
        %358 = vmatprep.subr.mxu0 0.0
        %359 = vmatpush1.msra.mxu0 0.0
        %360 = vmatprep.subr.mxu0 0.0
        %361 = vmatpush1.msra.mxu0 0.0
        %362 = vmatprep.subr.mxu0 0.0
        %363 = vmatpush1.msra.mxu0 0.0
        %364 = vmatprep.subr.mxu0 0.0
        %365 = vmatpush1.msra.mxu0 0.0
        %366 = vmatprep.subr.mxu0 0.0
        %367 = vmatpush1.msra.mxu0 0.0
        %368 = vmatprep.subr.mxu0 0.0
        %369 = vmatpush1.msra.mxu0 0.0
        %370 = vmatprep.subr.mxu0 0.0
        %371 = vmatpush1.msra.mxu0 0.0
        %372 = vmatprep.subr.mxu0 0.0
        %373 = vmatpush1.msra.mxu0 0.0
        %374 = vmatprep.subr.mxu0 0.0
        %375 = vmatpush1.msra.mxu0 0.0
        %376 = vmatprep.subr.mxu0 0.0
        %377 = vmatpush1.msra.mxu0 0.0
        %378 = vmatprep.mubr.f32.mxu0 0.0
        %379 = vmatmul.mubr.f32.gmra.mrb[0].mxu0 %v216
        %v380 = vpop.f32.mrb[0].mxu0
        %v381 = vadd.f32 0.0, %v380
        %v382 = vpop.f32.mrb[0].mxu0
        %383 = vmatprep.mubr.f32.mxu0 0.0
        %384 = vmatmul.mubr.f32.gmra.mrb[0].mxu0 %v219
        %v385 = vpop.f32.mrb[0].mxu0
        %v386 = vadd.f32 0.0, %v385
        %v387 = vpop.f32.mrb[0].mxu0
        %388 = vmatprep.mubr.f32.mxu0 0.0
        %389 = vmatmul.mubr.f32.gmra.mrb[0].mxu0 %v222
        %v390 = vpop.f32.mrb[0].mxu0
        %v391 = vadd.f32 0.0, %v390
        %v392 = vpop.f32.mrb[0].mxu0
        %393 = vmatprep.mubr.f32.mxu0 0.0
        %394 = vmatmul.mubr.f32.gmra.mrb[0].mxu0 %v225
        %v395 = vpop.f32.mrb[0].mxu0
        %v396 = vadd.f32 0.0, %v395
        %v397 = vpop.f32.mrb[0].mxu0
        %398 = vdwg.mxu0
        %v399 = vmax.f32 %v294, %v381
        %v400 = vmax.f32 %v299, %v386
        %v401 = vmax.f32 %v304, %v391
        %v402 = vmax.f32 %v309, %v396
        %v407 = vrot.slane %v400, 7
        %vm408 = vcmask 1041409
        %v409 = vsel %vm408, %v407, %v399
        %v410 = vrot.slane %v401, 6
        %vm411 = vcmask 1042434
        %v412 = vsel %vm411, %v410, %v409
        %v413 = vrot.slane %v402, 5
        %vm414 = vcmask 1043459
        %v415 = vsel %vm414, %v413, %v412
        %416 = vrot.lane.b32.xlu0 %v415, 11
        %v417 = vpop.permute.xlu0 %416
        %vm419 = vcmask 150616
        %420 = vst.msk [vmem:[%s182] sm:$0xf] %vm419, %v417
        %v421 = vsel %vm411, %v407, %v399
        %v422 = vsel %vm414, %v410, %v421
        %vm423 = vcmask 1044484
        %v424 = vsel %vm423, %v413, %v422
        %425 = vrot.lane.b32.xlu0 %v424, 21
        %v426 = vpop.permute.xlu0 %425
        %vm428 = vcmask 233641
        %429 = vst.msk [vmem:[%s182 - $0x1] sm:$0x1e] %vm428, %v426
        %v430 = vsel %vm414, %v407, %v399
        %v431 = vsel %vm423, %v410, %v430
        %vm432 = vcmask 1045509
        %v433 = vsel %vm432, %v413, %v431
        %434 = vrot.lane.b32.xlu0 %v433, 31
        %v435 = vpop.permute.xlu0 %434
        %vm437 = vcmask 316666
        %438 = vst.msk [vmem:[%s182 - $0x2] sm:$0x3c] %vm437, %v435
        %v439 = vsel %vm423, %v407, %v399
        %v440 = vsel %vm432, %v410, %v439
        %vm441 = vcmask 1046534
        %v442 = vsel %vm441, %v413, %v440
        %443 = vrot.lane.b32.xlu0 %v442, 41
        %v444 = vpop.permute.xlu0 %443
        %vm446 = vcmask 399691
        %447 = vst.msk [vmem:[%s182 - $0x3] sm:$0x78] %vm446, %v444
        %v448 = vsel %vm432, %v407, %v399
        %v449 = vsel %vm441, %v410, %v448
        %vm450 = vcmask 1047559
        %v451 = vsel %vm450, %v413, %v449
        %452 = vrot.lane.b32.xlu0 %v451, 51
        %v453 = vpop.permute.xlu0 %452
        %vm455 = vcmask 482716
        %456 = vst.msk [vmem:[%s182 - $0x4] sm:$0xf0] %vm455, %v453
        %v457 = vsel %vm441, %v407, %v399
        %v458 = vsel %vm450, %v410, %v457
        %459 = vrot.lane.b32.xlu0 %v458, 61
        %v460 = vpop.permute.xlu0 %459
        %461 = vrot.lane.b32.xlu0 %v413, 61
        %v462 = vpop.permute.xlu0 %461
        %vm465 = vcmask 564717
        %466 = vst.msk [vmem:[%s182 - $0x5] sm:$0xe0] %vm465, %v460
        %vm467 = vcmask 557544
        %468 = vst.msk [vmem:[%s182 + $0x3] sm:$0x1] %vm467, %v462
        %v469 = vsel %vm450, %v407, %v399
        %v470 = vsel %vm408, %v413, %v410
        %471 = vrot.lane.b32.xlu0 %v469, 71
        %v472 = vpop.permute.xlu0 %471
        %473 = vrot.lane.b32.xlu0 %v470, 71
        %v474 = vpop.permute.xlu0 %473
        %vm477 = vcmask 646718
        %478 = vst.msk [vmem:[%s182 - $0x6] sm:$0xc0] %vm477, %v472
        %vm479 = vcmask 640568
        %480 = vst.msk [vmem:[%s182 + $0x2] sm:$0x3] %vm479, %v474
        %v481 = vsel %vm408, %v410, %v407
        %v482 = vsel %vm411, %v413, %v481
        %483 = vrot.lane.b32.xlu0 %v399, 81
        %v484 = vpop.permute.xlu0 %483
        %485 = vrot.lane.b32.xlu0 %v482, 81
        %v486 = vpop.permute.xlu0 %485
        %vm489 = vcmask 728719
        %490 = vst.msk [vmem:[%s182 - $0x7] sm:$0x80] %vm489, %v484
        %vm491 = vcmask 723592
        %492 = vst.msk [vmem:[%s182 + $0x1] sm:$0x7] %vm491, %v486
      $region36: #{down_forward.5} parent=31 // pred_fallthru
        _
      %p493 = scmp.lt.s32.totalorder %s14, 3
      %s494 = scalar_select %p493, %s14, 3
      %s495 = smul.addr %s494, 8
      %s496 = scalar_lea.vmem %s3, %s495
      // Predicated region
      $region37: #{down_forward.5} parent=31 // pred_check
        %p497 = pneg %p104
      $region38: #{down_forward.5} parent=31 // pred_check_branch
        %499 = sbr.rel (%p497) target = $region40
      $region39: #{down_forward.5} parent=31 // pred_region
        _
      $region40: #{down_forward.5} parent=31 // pred_fallthru
        _
    $region32: #{down_forward.5} parent=5 // pred_fallthru
      _
    %p500 = scmp.le.s32.totalorder 2, %s9
    // Predicated region
    $region41: #{down_forward.5} parent=5 // pred_check
      %p501 = pneg %p500
    $region42: #{down_forward.5} parent=5 // pred_check_branch
      %503 = sbr.rel (%p501) target = $region44
    $region43: #{down_forward.5} parent=5 // pred_region
      %s504 = ssub.s32 %s9, 2
      // Predicated region
      $region45: #{down_forward.5} parent=43 // pred_check
        %p505 = pneg %p110
      $region46: #{down_forward.5} parent=43 // pred_check_branch
        %507 = sbr.rel (%p505) target = $region48
      $region47: #{down_forward.5} parent=43 // pred_region
        %p508 = scmp.lt.s32.totalorder %s15, 3
        %s509 = scalar_select %p508, %s15, 3
        %s510 = smul.addr %s509, 8
        %s511 = scalar_lea.vmem %s3, %s510
      $region48: #{down_forward.5} parent=43 // pred_fallthru
        _
    $region44: #{down_forward.5} parent=5 // pred_fallthru
      _
  $region6: #{down_forward.5} parent=0 // loop_footer
    %s13 = sadd.s32 1, %s9
  $region7: #{down_forward.5} parent=0 // loop_footer_branch
    %8 = sbr.rel target = $region3
  $region8: #{down_forward.5} parent=0 // loop_exit
    _

// kernel: down_forward.6
$region0: #{down_forward.6}
  #allocation0 [shape = 'u32[]', space=smem, size = 0x4, offset = 0x4, fixed_abs, tag = 'smem constant byte address 0x4 - core index']
  #allocation1 [shape = 'u32[144,128]{1,0:T(1,128)}', space=vmem, size = 0x12000, scoped, tag = 'internal scratch']
  #allocation2 [shape = 'f32[8,768]{1,0:T(8,128)}', space=vmem, size = 0x6000, scoped, tag = 'scratch operand']
  #allocation3 [shape = 'f32[24,514]{1,0:T(8,128)}', space=vmem, size = 0xf000, scoped, tag = 'scratch operand']
  %s0 = inlined_call_operand.vmem [shape: f32[8,512], index: 0, kind: input, shape index: {}, may-alias: {0,1,2}]
  %s1 = inlined_call_operand.vmem [shape: f32[8,512], index: 1, kind: input, shape index: {}, may-alias: {0,1,2}]
  %s2 = inlined_call_operand.vmem [shape: f32[8,512], index: 2, kind: input, shape index: {}, may-alias: {0,1,2}]
  %s3 = inlined_call_operand.vmem [shape: f32[3,8,24], index: 3, kind: input, shape index: {}]
  %s4 = inlined_call_operand.vmem [shape: f32[8,1], index: 4, kind: input, shape index: {}]
  %s5 = inlined_call_operand.vmem [shape: f32[1,512], index: 5, kind: input, shape index: {}]
  %s6 = inlined_call_operand.vmem [shape: f32[8,512], index: 6, kind: output, shape index: {0}]
  %s7 = inlined_call_operand.vmem [shape: f32[8,1], index: 7, kind: output, shape index: {1}]
  %s8 = inlined_call_operand.vmem [shape: f32[8,1], index: 8, kind: output, shape index: {2}]
  %9 = xla_tuple %s6, %s7, %s8
  %s10 = sld [smem:[#allocation0]]
  $region54: #{down_forward.6} parent=0
    _
  %s12 = ssub.s32 1, %s10
  %s13 = scalar_select 0, %s12, %s10
  // Predicated region
  $region2: #{down_forward.6} parent=0 // pred_check
    _
  $region3: #{down_forward.6} parent=0 // pred_check_branch
    %15 = sbr.rel (0) target = $region5
  $region4: #{down_forward.6} parent=0 // pred_region
    %s16 = smul.u32 0, 4
    %s17 = ssub.s32 %s16, 1
    %p18 = scmp.gt.s32.totalorder %s17, 0
    %s19 = scalar_select %p18, %s17, 0
    %p20 = scmp.lt.s32.totalorder %s19, 3
    %s21 = scalar_select %p20, %s19, 3
    %s22 = smul.addr %s21, 8
    %s23 = scalar_lea.vmem %s0, %s22
    %s24 = smul.u32 0, 4
    %s25 = ssub.s32 %s24, 1
    %p26 = scmp.gt.s32.totalorder %s25, 0
    %s27 = scalar_select %p26, %s25, 0
  $region5: #{down_forward.6} parent=0 // pred_fallthru
    _
  // Predicated region
  $region6: #{down_forward.6} parent=0 // pred_check
    _
  $region7: #{down_forward.6} parent=0 // pred_check_branch
    %29 = sbr.rel (0) target = $region9
  $region8: #{down_forward.6} parent=0 // pred_region
    _
  $region9: #{down_forward.6} parent=0 // pred_fallthru
    _
  // Predicated region
  $region10: #{down_forward.6} parent=0 // pred_check
    _
  $region11: #{down_forward.6} parent=0 // pred_check_branch
    %31 = sbr.rel (0) target = $region13
  $region12: #{down_forward.6} parent=0 // pred_region
    %s32 = sadd.s32 0, 1
    %s33 = smul.u32 %s32, 4
    %p34 = scmp.lt.s32.totalorder %s33, 3
    %s35 = scalar_select %p34, %s33, 3
    %p36 = scmp.lt.s32.totalorder %s35, 3
    %s37 = scalar_select %p36, %s35, 3
    %s38 = smul.addr %s37, 8
    %s39 = scalar_lea.vmem %s2, %s38
    %s40 = sadd.s32 0, 1
    %s41 = smul.u32 %s40, 4
    %p42 = scmp.lt.s32.totalorder %s41, 3
    %s43 = scalar_select %p42, %s41, 3
  $region13: #{down_forward.6} parent=0 // pred_fallthru
    _
  // Predicated region
  $region14: #{down_forward.6} parent=0 // pred_check
    _
  $region15: #{down_forward.6} parent=0 // pred_check_branch
    %45 = sbr.rel (0) target = $region17
  $region16: #{down_forward.6} parent=0 // pred_region
    _
  $region17: #{down_forward.6} parent=0 // pred_fallthru
    _
  // Predicated region
  $region18: #{down_forward.6} parent=0 // pred_check
    _
  $region19: #{down_forward.6} parent=0 // pred_check_branch
    %47 = sbr.rel (0) target = $region21
  $region20: #{down_forward.6} parent=0 // pred_region
    _
  $region21: #{down_forward.6} parent=0 // pred_fallthru
    _
  // Predicated region
  $region22: #{down_forward.6} parent=0 // pred_check
    _
  $region23: #{down_forward.6} parent=0 // pred_check_branch
    %49 = sbr.rel (0) target = $region25
  $region24: #{down_forward.6} parent=0 // pred_region
    _
  $region25: #{down_forward.6} parent=0 // pred_fallthru
    _
  %s50 = smul.u32 0, 4
  %s51 = ssub.s32 %s50, 1
  %p52 = scmp.gt.s32.totalorder %s51, 0
  %s53 = scalar_select %p52, %s51, 0
  %p54 = scmp.lt.s32.totalorder %s53, 3
  %s55 = scalar_select %p54, %s53, 3
  %s56 = smul.addr %s55, 8
  %s57 = scalar_lea.vmem %s0, %s56
  %s58 = sadd.s32 0, 1
  %s59 = smul.u32 %s58, 4
  %p60 = scmp.lt.s32.totalorder %s59, 3
  %s61 = scalar_select %p60, %s59, 3
  %p62 = scmp.lt.s32.totalorder %s61, 3
  %s63 = scalar_select %p62, %s61, 3
  %s64 = smul.addr %s63, 8
  %s65 = scalar_lea.vmem %s2, %s64
  %s66 = smul.u32 0, 4
  %s67 = ssub.s32 %s66, 1
  %p68 = scmp.gt.s32.totalorder %s67, 0
  %s69 = scalar_select %p68, %s67, 0
  %p70 = scmp.lt.s32.totalorder %s69, 3
  %s71 = scalar_select %p70, %s69, 3
  %s72 = smul.addr %s71, 8
  %s73 = scalar_lea.vmem %s0, %s72
  %s74 = smul.u32 0, 4
  %s75 = ssub.s32 %s74, 1
  %p76 = scmp.gt.s32.totalorder %s75, 0
  %s77 = scalar_select %p76, %s75, 0
  %s78 = sadd.s32 0, 1
  %s79 = smul.u32 %s78, 4
  %p80 = scmp.lt.s32.totalorder %s79, 3
  %s81 = scalar_select %p80, %s79, 3
  %p82 = scmp.lt.s32.totalorder %s81, 3
  %s83 = scalar_select %p82, %s81, 3
  %s84 = smul.addr %s83, 8
  %s85 = scalar_lea.vmem %s2, %s84
  %s86 = sadd.s32 0, 1
  %s87 = smul.u32 %s86, 4
  %p88 = scmp.lt.s32.totalorder %s87, 3
  %s89 = scalar_select %p88, %s87, 3
  %v90 = vld [vmem:[%s73] sm:$0xff]
  %91 = vst [vmem:[#allocation2] sm:$0xff] %v90
  %v92 = vld [vmem:[%s1] sm:$0xff]
  %v93 = vld [vmem:[%s1 + $0x8] sm:$0xff]
  %v94 = vld [vmem:[%s1 + $0x10] sm:$0xff]
  %v95 = vld [vmem:[%s1 + $0x18] sm:$0xff]
  %96 = vst [vmem:[#allocation2 + $0x8] sm:$0xff] %v92
  %97 = vst [vmem:[#allocation2 + $0x10] sm:$0xff] %v93
  %98 = vst [vmem:[#allocation2 + $0x18] sm:$0xff] %v94
  %99 = vst [vmem:[#allocation2 + $0x20] sm:$0xff] %v95
  %v100 = vld [vmem:[%s85] sm:$0xff]
  %101 = vst [vmem:[#allocation2 + $0x28] sm:$0xff] %v100
  %v102 = vld [vmem:[#allocation2] sm:$0xff]
  %v103 = vld [vmem:[#allocation2 + $0x8] sm:$0xff]
  %v104 = vld [vmem:[#allocation2 + $0x10] sm:$0xff]
  %v105 = vld [vmem:[#allocation2 + $0x18] sm:$0xff]
  %v106 = vld [vmem:[#allocation2 + $0x20] sm:$0xff]
  %112 = vrot.lane.b32.xlu0 %v102, 11
  %v113 = vpop.permute.xlu0 %112
  %114 = vrot.lane.b32.xlu0 %v103, 11
  %v115 = vpop.permute.xlu0 %114
  %116 = vrot.lane.b32.xlu0 %v104, 11
  %v117 = vpop.permute.xlu0 %116
  %118 = vrot.lane.b32.xlu0 %v105, 11
  %v119 = vpop.permute.xlu0 %118
  %120 = vrot.lane.b32.xlu0 %v106, 11
  %v121 = vpop.permute.xlu0 %120
  %vm122 = vcmask 89088
  %v123 = vsel %vm122, %v113, %v115
  %v124 = vsel %vm122, %v115, %v117
  %v125 = vsel %vm122, %v117, %v119
  %v126 = vsel %vm122, %v119, %v121
  %132 = vst [vmem:[#allocation3] sm:$0xff] %v123
  %133 = vst [vmem:[#allocation3 + $0x8] sm:$0xff] %v124
  %134 = vst [vmem:[#allocation3 + $0x10] sm:$0xff] %v125
  %135 = vst [vmem:[#allocation3 + $0x18] sm:$0xff] %v126
  %vm136 = vcmask 15360
  %137 = vst.msk [vmem:[#allocation3 + $0x20] sm:$0xff] %vm136, %v121
  %v138 = vld [vmem:[#allocation2] sm:$0xff]
  %v139 = vld [vmem:[#allocation2 + $0x8] sm:$0xff]
  %v140 = vld [vmem:[#allocation2 + $0x10] sm:$0xff]
  %v141 = vld [vmem:[#allocation2 + $0x18] sm:$0xff]
  %v142 = vld [vmem:[#allocation2 + $0x20] sm:$0xff]
  %v143 = vld [vmem:[#allocation2 + $0x28] sm:$0xff]
  %150 = vrot.lane.b32.xlu0 %v138, 1
  %v151 = vpop.permute.xlu0 %150
  %152 = vrot.lane.b32.xlu0 %v139, 1
  %v153 = vpop.permute.xlu0 %152
  %154 = vrot.lane.b32.xlu0 %v140, 1
  %v155 = vpop.permute.xlu0 %154
  %156 = vrot.lane.b32.xlu0 %v141, 1
  %v157 = vpop.permute.xlu0 %156
  %158 = vrot.lane.b32.xlu0 %v142, 1
  %v159 = vpop.permute.xlu0 %158
  %160 = vrot.lane.b32.xlu0 %v143, 1
  %v161 = vpop.permute.xlu0 %160
  %vm162 = vcmask 7168
  %v163 = vsel %vm162, %v151, %v153
  %v164 = vsel %vm162, %v153, %v155
  %v165 = vsel %vm162, %v155, %v157
  %v166 = vsel %vm162, %v157, %v159
  %v167 = vsel %vm162, %v159, %v161
  %173 = vst [vmem:[#allocation3 + $0x28] sm:$0xff] %v163
  %174 = vst [vmem:[#allocation3 + $0x30] sm:$0xff] %v164
  %175 = vst [vmem:[#allocation3 + $0x38] sm:$0xff] %v165
  %176 = vst [vmem:[#allocation3 + $0x40] sm:$0xff] %v166
  %177 = vst.msk [vmem:[#allocation3 + $0x48] sm:$0xff] %vm136, %v167
  %v178 = vld [vmem:[#allocation2 + $0x8] sm:$0xff]
  %v179 = vld [vmem:[#allocation2 + $0x10] sm:$0xff]
  %v180 = vld [vmem:[#allocation2 + $0x18] sm:$0xff]
  %v181 = vld [vmem:[#allocation2 + $0x20] sm:$0xff]
  %v182 = vld [vmem:[#allocation2 + $0x28] sm:$0xff]
  %188 = vrot.lane.b32.xlu0 %v178, 119
  %v189 = vpop.permute.xlu0 %188
  %190 = vrot.lane.b32.xlu0 %v179, 119
  %v191 = vpop.permute.xlu0 %190
  %192 = vrot.lane.b32.xlu0 %v180, 119
  %v193 = vpop.permute.xlu0 %192
  %194 = vrot.lane.b32.xlu0 %v181, 119
  %v195 = vpop.permute.xlu0 %194
  %196 = vrot.lane.b32.xlu0 %v182, 119
  %v197 = vpop.permute.xlu0 %196
  %vm198 = vcmask 973824
  %v199 = vsel %vm198, %v189, %v191
  %v200 = vsel %vm198, %v191, %v193
  %v201 = vsel %vm198, %v193, %v195
  %v202 = vsel %vm198, %v195, %v197
  %208 = vst [vmem:[#allocation3 + $0x50] sm:$0xff] %v199
  %209 = vst [vmem:[#allocation3 + $0x58] sm:$0xff] %v200
  %210 = vst [vmem:[#allocation3 + $0x60] sm:$0xff] %v201
  %211 = vst [vmem:[#allocation3 + $0x68] sm:$0xff] %v202
  %212 = vst.msk [vmem:[#allocation3 + $0x70] sm:$0xff] %vm136, %v197
  %v213 = vld [vmem:[%s4] sm:$0xff]
  %v214 = vld [vmem:[%s3] sm:$0xff]
  %v215 = vld [vmem:[#allocation3] sm:$0xff]
  %v216 = vld [vmem:[#allocation3 + $0x8] sm:$0xff]
  %v217 = vld [vmem:[#allocation3 + $0x10] sm:$0xff]
  %v218 = vld [vmem:[#allocation3 + $0x18] sm:$0xff]
  %v219 = vld [vmem:[#allocation3 + $0x28] sm:$0xff]
  %v220 = vld [vmem:[#allocation3 + $0x30] sm:$0xff]
  %v221 = vld [vmem:[#allocation3 + $0x38] sm:$0xff]
  %v222 = vld [vmem:[#allocation3 + $0x40] sm:$0xff]
  %v223 = vld [vmem:[#allocation3 + $0x50] sm:$0xff]
  %v224 = vld [vmem:[#allocation3 + $0x58] sm:$0xff]
  %v225 = vld [vmem:[#allocation3 + $0x60] sm:$0xff]
  %v226 = vld [vmem:[#allocation3 + $0x68] sm:$0xff]
  %vm227 = vcmask 195584
  %v229 = vsel %vm227, %v214, 0
  %231 = vmatprep.subr.mxu0 %v216
  %232 = vmatpush1.msra.mxu0 %v215
  %233 = vmatprep.subr.mxu0 %v220
  %234 = vmatpush1.msra.mxu0 %v219
  %235 = vmatprep.subr.mxu0 %v224
  %236 = vmatpush1.msra.mxu0 %v223
  %237 = vmatprep.subr.mxu0 0.0
  %238 = vmatpush1.msra.mxu0 0.0
  %239 = vmatprep.subr.mxu0 0.0
  %240 = vmatpush1.msra.mxu0 0.0
  %241 = vmatprep.subr.mxu0 0.0
  %242 = vmatpush1.msra.mxu0 0.0
  %243 = vmatprep.subr.mxu0 0.0
  %244 = vmatpush1.msra.mxu0 0.0
  %245 = vmatprep.subr.mxu0 0.0
  %246 = vmatpush1.msra.mxu0 0.0
  %247 = vmatprep.subr.mxu0 0.0
  %248 = vmatpush1.msra.mxu0 0.0
  %249 = vmatprep.subr.mxu0 0.0
  %250 = vmatpush1.msra.mxu0 0.0
  %251 = vmatprep.subr.mxu0 0.0
  %252 = vmatpush1.msra.mxu0 0.0
  %253 = vmatprep.subr.mxu0 0.0
  %254 = vmatpush1.msra.mxu0 0.0
  %255 = vmatprep.subr.mxu0 0.0
  %256 = vmatpush1.msra.mxu0 0.0
  %257 = vmatprep.subr.mxu0 0.0
  %258 = vmatpush1.msra.mxu0 0.0
  %259 = vmatprep.subr.mxu0 0.0
  %260 = vmatpush1.msra.mxu0 0.0
  %261 = vmatprep.subr.mxu0 0.0
  %262 = vmatpush1.msra.mxu0 0.0
  %263 = vmatprep.subr.mxu0 0.0
  %264 = vmatpush1.msra.mxu0 0.0
  %265 = vmatprep.subr.mxu0 0.0
  %266 = vmatpush1.msra.mxu0 0.0
  %267 = vmatprep.subr.mxu0 0.0
  %268 = vmatpush1.msra.mxu0 0.0
  %269 = vmatprep.subr.mxu0 0.0
  %270 = vmatpush1.msra.mxu0 0.0
  %271 = vmatprep.subr.mxu0 0.0
  %272 = vmatpush1.msra.mxu0 0.0
  %273 = vmatprep.subr.mxu0 0.0
  %274 = vmatpush1.msra.mxu0 0.0
  %275 = vmatprep.subr.mxu0 0.0
  %276 = vmatpush1.msra.mxu0 0.0
  %277 = vmatprep.subr.mxu0 0.0
  %278 = vmatpush1.msra.mxu0 0.0
  %279 = vmatprep.subr.mxu0 0.0
  %280 = vmatpush1.msra.mxu0 0.0
  %281 = vmatprep.subr.mxu0 0.0
  %282 = vmatpush1.msra.mxu0 0.0
  %283 = vmatprep.subr.mxu0 0.0
  %284 = vmatpush1.msra.mxu0 0.0
  %285 = vmatprep.subr.mxu0 0.0
  %286 = vmatpush1.msra.mxu0 0.0
  %287 = vmatprep.subr.mxu0 0.0
  %288 = vmatpush1.msra.mxu0 0.0
  %289 = vmatprep.subr.mxu0 0.0
  %290 = vmatpush1.msra.mxu0 0.0
  %291 = vmatprep.subr.mxu0 0.0
  %292 = vmatpush1.msra.mxu0 0.0
  %293 = vmatprep.subr.mxu0 0.0
  %294 = vmatpush1.msra.mxu0 0.0
  %295 = vmatprep.mubr.f32.mxu0 0.0
  %296 = vmatmul.mubr.f32.gmra.mrb[0].mxu0 %v229
  %v297 = vpop.f32.mrb[0].mxu0
  %v298 = vadd.f32 0.0, %v297
  %v299 = vpop.f32.mrb[0].mxu0
  %v300 = vadd.f32 0.0, %v299
  %301 = vdwg.mxu0
  %302 = vmatprep.subr.mxu0 %v218
  %303 = vmatpush1.msra.mxu0 %v217
  %304 = vmatprep.subr.mxu0 %v222
  %305 = vmatpush1.msra.mxu0 %v221
  %306 = vmatprep.subr.mxu0 %v226
  %307 = vmatpush1.msra.mxu0 %v225
  %308 = vmatprep.subr.mxu0 0.0
  %309 = vmatpush1.msra.mxu0 0.0
  %310 = vmatprep.subr.mxu0 0.0
  %311 = vmatpush1.msra.mxu0 0.0
  %312 = vmatprep.subr.mxu0 0.0
  %313 = vmatpush1.msra.mxu0 0.0
  %314 = vmatprep.subr.mxu0 0.0
  %315 = vmatpush1.msra.mxu0 0.0
  %316 = vmatprep.subr.mxu0 0.0
  %317 = vmatpush1.msra.mxu0 0.0
  %318 = vmatprep.subr.mxu0 0.0
  %319 = vmatpush1.msra.mxu0 0.0
  %320 = vmatprep.subr.mxu0 0.0
  %321 = vmatpush1.msra.mxu0 0.0
  %322 = vmatprep.subr.mxu0 0.0
  %323 = vmatpush1.msra.mxu0 0.0
  %324 = vmatprep.subr.mxu0 0.0
  %325 = vmatpush1.msra.mxu0 0.0
  %326 = vmatprep.subr.mxu0 0.0
  %327 = vmatpush1.msra.mxu0 0.0
  %328 = vmatprep.subr.mxu0 0.0
  %329 = vmatpush1.msra.mxu0 0.0
  %330 = vmatprep.subr.mxu0 0.0
  %331 = vmatpush1.msra.mxu0 0.0
  %332 = vmatprep.subr.mxu0 0.0
  %333 = vmatpush1.msra.mxu0 0.0
  %334 = vmatprep.subr.mxu0 0.0
  %335 = vmatpush1.msra.mxu0 0.0
  %336 = vmatprep.subr.mxu0 0.0
  %337 = vmatpush1.msra.mxu0 0.0
  %338 = vmatprep.subr.mxu0 0.0
  %339 = vmatpush1.msra.mxu0 0.0
  %340 = vmatprep.subr.mxu0 0.0
  %341 = vmatpush1.msra.mxu0 0.0
  %342 = vmatprep.subr.mxu0 0.0
  %343 = vmatpush1.msra.mxu0 0.0
  %344 = vmatprep.subr.mxu0 0.0
  %345 = vmatpush1.msra.mxu0 0.0
  %346 = vmatprep.subr.mxu0 0.0
  %347 = vmatpush1.msra.mxu0 0.0
  %348 = vmatprep.subr.mxu0 0.0
  %349 = vmatpush1.msra.mxu0 0.0
  %350 = vmatprep.subr.mxu0 0.0
  %351 = vmatpush1.msra.mxu0 0.0
  %352 = vmatprep.subr.mxu0 0.0
  %353 = vmatpush1.msra.mxu0 0.0
  %354 = vmatprep.subr.mxu0 0.0
  %355 = vmatpush1.msra.mxu0 0.0
  %356 = vmatprep.subr.mxu0 0.0
  %357 = vmatpush1.msra.mxu0 0.0
  %358 = vmatprep.subr.mxu0 0.0
  %359 = vmatpush1.msra.mxu0 0.0
  %360 = vmatprep.subr.mxu0 0.0
  %361 = vmatpush1.msra.mxu0 0.0
  %362 = vmatprep.subr.mxu0 0.0
  %363 = vmatpush1.msra.mxu0 0.0
  %364 = vmatprep.subr.mxu0 0.0
  %365 = vmatpush1.msra.mxu0 0.0
  %366 = vmatprep.mubr.f32.mxu0 0.0
  %367 = vmatmul.mubr.f32.gmra.mrb[0].mxu0 %v229
  %v368 = vpop.f32.mrb[0].mxu0
  %v369 = vadd.f32 0.0, %v368
  %v370 = vpop.f32.mrb[0].mxu0
  %v371 = vadd.f32 0.0, %v370
  %372 = vdwg.mxu0
  %374 = vset.pattern.permute.xlu0 0
  %375 = vperm.xlu0 %374, %v213
  %v376 = vpop.permute.xlu0 %375
  %v378 = vadd.f32 %v376, %v298
  %v379 = vadd.f32 %v376, %v300
  %v380 = vadd.f32 %v376, %v369
  %v381 = vadd.f32 %v376, %v371
  %s382 = scalar_lea.vmem %s3, 8
  %v383 = vld [vmem:[%s382] sm:$0xff]
  %v384 = vld [vmem:[#allocation3] sm:$0xff]
  %v385 = vld [vmem:[#allocation3 + $0x8] sm:$0xff]
  %v386 = vld [vmem:[#allocation3 + $0x10] sm:$0xff]
  %v387 = vld [vmem:[#allocation3 + $0x18] sm:$0xff]
  %v388 = vld [vmem:[#allocation3 + $0x20] sm:$0xff]
  %v389 = vld [vmem:[#allocation3 + $0x28] sm:$0xff]
  %v390 = vld [vmem:[#allocation3 + $0x30] sm:$0xff]
  %v391 = vld [vmem:[#allocation3 + $0x38] sm:$0xff]
  %v392 = vld [vmem:[#allocation3 + $0x40] sm:$0xff]
  %v393 = vld [vmem:[#allocation3 + $0x48] sm:$0xff]
  %v394 = vld [vmem:[#allocation3 + $0x50] sm:$0xff]
  %v395 = vld [vmem:[#allocation3 + $0x58] sm:$0xff]
  %v396 = vld [vmem:[#allocation3 + $0x60] sm:$0xff]
  %v397 = vld [vmem:[#allocation3 + $0x68] sm:$0xff]
  %v398 = vld [vmem:[#allocation3 + $0x70] sm:$0xff]
  %414 = vrot.lane.b32.xlu0 %v384, 127
  %v415 = vpop.permute.xlu0 %414
  %416 = vrot.lane.b32.xlu0 %v385, 127
  %v417 = vpop.permute.xlu0 %416
  %418 = vrot.lane.b32.xlu0 %v386, 127
  %v419 = vpop.permute.xlu0 %418
  %420 = vrot.lane.b32.xlu0 %v387, 127
  %v421 = vpop.permute.xlu0 %420
  %422 = vrot.lane.b32.xlu0 %v388, 127
  %v423 = vpop.permute.xlu0 %422
  %424 = vrot.lane.b32.xlu0 %v389, 127
  %v425 = vpop.permute.xlu0 %424
  %426 = vrot.lane.b32.xlu0 %v390, 127
  %v427 = vpop.permute.xlu0 %426
  %428 = vrot.lane.b32.xlu0 %v391, 127
  %v429 = vpop.permute.xlu0 %428
  %430 = vrot.lane.b32.xlu0 %v392, 127
  %v431 = vpop.permute.xlu0 %430
  %432 = vrot.lane.b32.xlu0 %v393, 127
  %v433 = vpop.permute.xlu0 %432
  %434 = vrot.lane.b32.xlu0 %v394, 127
  %v435 = vpop.permute.xlu0 %434
  %436 = vrot.lane.b32.xlu0 %v395, 127
  %v437 = vpop.permute.xlu0 %436
  %438 = vrot.lane.b32.xlu0 %v396, 127
  %v439 = vpop.permute.xlu0 %438
  %440 = vrot.lane.b32.xlu0 %v397, 127
  %v441 = vpop.permute.xlu0 %440
  %442 = vrot.lane.b32.xlu0 %v398, 127
  %v443 = vpop.permute.xlu0 %442
  %vm444 = vcmask 1039360
  %v445 = vsel %vm444, %v415, %v417
  %v446 = vsel %vm444, %v417, %v419
  %v447 = vsel %vm444, %v419, %v421
  %v448 = vsel %vm444, %v421, %v423
  %v449 = vsel %vm444, %v425, %v427
  %v450 = vsel %vm444, %v427, %v429
  %v451 = vsel %vm444, %v429, %v431
  %v452 = vsel %vm444, %v431, %v433
  %v453 = vsel %vm444, %v435, %v437
  %v454 = vsel %vm444, %v437, %v439
  %v455 = vsel %vm444, %v439, %v441
  %v456 = vsel %vm444, %v441, %v443
  %v470 = vsel %vm227, %v383, 0
  %472 = vmatprep.subr.mxu0 %v446
  %473 = vmatpush1.msra.mxu0 %v445
  %474 = vmatprep.subr.mxu0 %v450
  %475 = vmatpush1.msra.mxu0 %v449
  %476 = vmatprep.subr.mxu0 %v454
  %477 = vmatpush1.msra.mxu0 %v453
  %478 = vmatprep.subr.mxu0 0.0
  %479 = vmatpush1.msra.mxu0 0.0
  %480 = vmatprep.subr.mxu0 0.0
  %481 = vmatpush1.msra.mxu0 0.0
  %482 = vmatprep.subr.mxu0 0.0
  %483 = vmatpush1.msra.mxu0 0.0
  %484 = vmatprep.subr.mxu0 0.0
  %485 = vmatpush1.msra.mxu0 0.0
  %486 = vmatprep.subr.mxu0 0.0
  %487 = vmatpush1.msra.mxu0 0.0
  %488 = vmatprep.subr.mxu0 0.0
  %489 = vmatpush1.msra.mxu0 0.0
  %490 = vmatprep.subr.mxu0 0.0
  %491 = vmatpush1.msra.mxu0 0.0
  %492 = vmatprep.subr.mxu0 0.0
  %493 = vmatpush1.msra.mxu0 0.0
  %494 = vmatprep.subr.mxu0 0.0
  %495 = vmatpush1.msra.mxu0 0.0
  %496 = vmatprep.subr.mxu0 0.0
  %497 = vmatpush1.msra.mxu0 0.0
  %498 = vmatprep.subr.mxu0 0.0
  %499 = vmatpush1.msra.mxu0 0.0
  %500 = vmatprep.subr.mxu0 0.0
  %501 = vmatpush1.msra.mxu0 0.0
  %502 = vmatprep.subr.mxu0 0.0
  %503 = vmatpush1.msra.mxu0 0.0
  %504 = vmatprep.subr.mxu0 0.0
  %505 = vmatpush1.msra.mxu0 0.0
  %506 = vmatprep.subr.mxu0 0.0
  %507 = vmatpush1.msra.mxu0 0.0
  %508 = vmatprep.subr.mxu0 0.0
  %509 = vmatpush1.msra.mxu0 0.0
  %510 = vmatprep.subr.mxu0 0.0
  %511 = vmatpush1.msra.mxu0 0.0
  %512 = vmatprep.subr.mxu0 0.0
  %513 = vmatpush1.msra.mxu0 0.0
  %514 = vmatprep.subr.mxu0 0.0
  %515 = vmatpush1.msra.mxu0 0.0
  %516 = vmatprep.subr.mxu0 0.0
  %517 = vmatpush1.msra.mxu0 0.0
  %518 = vmatprep.subr.mxu0 0.0
  %519 = vmatpush1.msra.mxu0 0.0
  %520 = vmatprep.subr.mxu0 0.0
  %521 = vmatpush1.msra.mxu0 0.0
  %522 = vmatprep.subr.mxu0 0.0
  %523 = vmatpush1.msra.mxu0 0.0
  %524 = vmatprep.subr.mxu0 0.0
  %525 = vmatpush1.msra.mxu0 0.0
  %526 = vmatprep.subr.mxu0 0.0
  %527 = vmatpush1.msra.mxu0 0.0
  %528 = vmatprep.subr.mxu0 0.0
  %529 = vmatpush1.msra.mxu0 0.0
  %530 = vmatprep.subr.mxu0 0.0
  %531 = vmatpush1.msra.mxu0 0.0
  %532 = vmatprep.subr.mxu0 0.0
  %533 = vmatpush1.msra.mxu0 0.0
  %534 = vmatprep.subr.mxu0 0.0
  %535 = vmatpush1.msra.mxu0 0.0
  %536 = vmatprep.mubr.f32.mxu0 0.0
  %537 = vmatmul.mubr.f32.gmra.mrb[0].mxu0 %v470
  %v538 = vpop.f32.mrb[0].mxu0
  %v539 = vadd.f32 0.0, %v538
  %v540 = vpop.f32.mrb[0].mxu0
  %v541 = vadd.f32 0.0, %v540
  %542 = vdwg.mxu0
  %543 = vmatprep.subr.mxu0 %v448
  %544 = vmatpush1.msra.mxu0 %v447
  %545 = vmatprep.subr.mxu0 %v452
  %546 = vmatpush1.msra.mxu0 %v451
  %547 = vmatprep.subr.mxu0 %v456
  %548 = vmatpush1.msra.mxu0 %v455
  %549 = vmatprep.subr.mxu0 0.0
  %550 = vmatpush1.msra.mxu0 0.0
  %551 = vmatprep.subr.mxu0 0.0
  %552 = vmatpush1.msra.mxu0 0.0
  %553 = vmatprep.subr.mxu0 0.0
  %554 = vmatpush1.msra.mxu0 0.0
  %555 = vmatprep.subr.mxu0 0.0
  %556 = vmatpush1.msra.mxu0 0.0
  %557 = vmatprep.subr.mxu0 0.0
  %558 = vmatpush1.msra.mxu0 0.0
  %559 = vmatprep.subr.mxu0 0.0
  %560 = vmatpush1.msra.mxu0 0.0
  %561 = vmatprep.subr.mxu0 0.0
  %562 = vmatpush1.msra.mxu0 0.0
  %563 = vmatprep.subr.mxu0 0.0
  %564 = vmatpush1.msra.mxu0 0.0
  %565 = vmatprep.subr.mxu0 0.0
  %566 = vmatpush1.msra.mxu0 0.0
  %567 = vmatprep.subr.mxu0 0.0
  %568 = vmatpush1.msra.mxu0 0.0
  %569 = vmatprep.subr.mxu0 0.0
  %570 = vmatpush1.msra.mxu0 0.0
  %571 = vmatprep.subr.mxu0 0.0
  %572 = vmatpush1.msra.mxu0 0.0
  %573 = vmatprep.subr.mxu0 0.0
  %574 = vmatpush1.msra.mxu0 0.0
  %575 = vmatprep.subr.mxu0 0.0
  %576 = vmatpush1.msra.mxu0 0.0
  %577 = vmatprep.subr.mxu0 0.0
  %578 = vmatpush1.msra.mxu0 0.0
  %579 = vmatprep.subr.mxu0 0.0
  %580 = vmatpush1.msra.mxu0 0.0
  %581 = vmatprep.subr.mxu0 0.0
  %582 = vmatpush1.msra.mxu0 0.0
  %583 = vmatprep.subr.mxu0 0.0
  %584 = vmatpush1.msra.mxu0 0.0
  %585 = vmatprep.subr.mxu0 0.0
  %586 = vmatpush1.msra.mxu0 0.0
  %587 = vmatprep.subr.mxu0 0.0
  %588 = vmatpush1.msra.mxu0 0.0
  %589 = vmatprep.subr.mxu0 0.0
  %590 = vmatpush1.msra.mxu0 0.0
  %591 = vmatprep.subr.mxu0 0.0
  %592 = vmatpush1.msra.mxu0 0.0
  %593 = vmatprep.subr.mxu0 0.0
  %594 = vmatpush1.msra.mxu0 0.0
  %595 = vmatprep.subr.mxu0 0.0
  %596 = vmatpush1.msra.mxu0 0.0
  %597 = vmatprep.subr.mxu0 0.0
  %598 = vmatpush1.msra.mxu0 0.0
  %599 = vmatprep.subr.mxu0 0.0
  %600 = vmatpush1.msra.mxu0 0.0
  %601 = vmatprep.subr.mxu0 0.0
  %602 = vmatpush1.msra.mxu0 0.0
  %603 = vmatprep.subr.mxu0 0.0
  %604 = vmatpush1.msra.mxu0 0.0
  %605 = vmatprep.subr.mxu0 0.0
  %606 = vmatpush1.msra.mxu0 0.0
  %607 = vmatprep.mubr.f32.mxu0 0.0
  %608 = vmatmul.mubr.f32.gmra.mrb[0].mxu0 %v470
  %v609 = vpop.f32.mrb[0].mxu0
  %v610 = vadd.f32 0.0, %v609
  %v611 = vpop.f32.mrb[0].mxu0
  %v612 = vadd.f32 0.0, %v611
  %613 = vdwg.mxu0
  %v614 = vadd.f32 %v378, %v539
  %v615 = vadd.f32 %v379, %v541
  %v616 = vadd.f32 %v380, %v610
  %v617 = vadd.f32 %v381, %v612
  %s618 = scalar_lea.vmem %s3, 16
  %v619 = vld [vmem:[%s618] sm:$0xff]
  %620 = vrot.lane.b32.xlu0 %v384, 126
  %v621 = vpop.permute.xlu0 %620
  %622 = vrot.lane.b32.xlu0 %v385, 126
  %v623 = vpop.permute.xlu0 %622
  %624 = vrot.lane.b32.xlu0 %v386, 126
  %v625 = vpop.permute.xlu0 %624
  %626 = vrot.lane.b32.xlu0 %v387, 126
  %v627 = vpop.permute.xlu0 %626
  %628 = vrot.lane.b32.xlu0 %v388, 126
  %v629 = vpop.permute.xlu0 %628
  %630 = vrot.lane.b32.xlu0 %v389, 126
  %v631 = vpop.permute.xlu0 %630
  %632 = vrot.lane.b32.xlu0 %v390, 126
  %v633 = vpop.permute.xlu0 %632
  %634 = vrot.lane.b32.xlu0 %v391, 126
  %v635 = vpop.permute.xlu0 %634
  %636 = vrot.lane.b32.xlu0 %v392, 126
  %v637 = vpop.permute.xlu0 %636
  %638 = vrot.lane.b32.xlu0 %v393, 126
  %v639 = vpop.permute.xlu0 %638
  %640 = vrot.lane.b32.xlu0 %v394, 126
  %v641 = vpop.permute.xlu0 %640
  %642 = vrot.lane.b32.xlu0 %v395, 126
  %v643 = vpop.permute.xlu0 %642
  %644 = vrot.lane.b32.xlu0 %v396, 126
  %v645 = vpop.permute.xlu0 %644
  %646 = vrot.lane.b32.xlu0 %v397, 126
  %v647 = vpop.permute.xlu0 %646
  %648 = vrot.lane.b32.xlu0 %v398, 126
  %v649 = vpop.permute.xlu0 %648
  %vm650 = vcmask 1031168
  %v651 = vsel %vm650, %v621, %v623
  %v652 = vsel %vm650, %v623, %v625
  %v653 = vsel %vm650, %v625, %v627
  %v654 = vsel %vm650, %v627, %v629
  %v655 = vsel %vm650, %v631, %v633
  %v656 = vsel %vm650, %v633, %v635
  %v657 = vsel %vm650, %v635, %v637
  %v658 = vsel %vm650, %v637, %v639
  %v659 = vsel %vm650, %v641, %v643
  %v660 = vsel %vm650, %v643, %v645
  %v661 = vsel %vm650, %v645, %v647
  %v662 = vsel %vm650, %v647, %v649
  %v676 = vsel %vm227, %v619, 0
  %678 = vmatprep.subr.mxu0 %v652
  %679 = vmatpush1.msra.mxu0 %v651
  %680 = vmatprep.subr.mxu0 %v656
  %681 = vmatpush1.msra.mxu0 %v655
  %682 = vmatprep.subr.mxu0 %v660
  %683 = vmatpush1.msra.mxu0 %v659
  %684 = vmatprep.subr.mxu0 0.0
  %685 = vmatpush1.msra.mxu0 0.0
  %686 = vmatprep.subr.mxu0 0.0
  %687 = vmatpush1.msra.mxu0 0.0
  %688 = vmatprep.subr.mxu0 0.0
  %689 = vmatpush1.msra.mxu0 0.0
  %690 = vmatprep.subr.mxu0 0.0
  %691 = vmatpush1.msra.mxu0 0.0
  %692 = vmatprep.subr.mxu0 0.0
  %693 = vmatpush1.msra.mxu0 0.0
  %694 = vmatprep.subr.mxu0 0.0
  %695 = vmatpush1.msra.mxu0 0.0
  %696 = vmatprep.subr.mxu0 0.0
  %697 = vmatpush1.msra.mxu0 0.0
  %698 = vmatprep.subr.mxu0 0.0
  %699 = vmatpush1.msra.mxu0 0.0
  %700 = vmatprep.subr.mxu0 0.0
  %701 = vmatpush1.msra.mxu0 0.0
  %702 = vmatprep.subr.mxu0 0.0
  %703 = vmatpush1.msra.mxu0 0.0
  %704 = vmatprep.subr.mxu0 0.0
  %705 = vmatpush1.msra.mxu0 0.0
  %706 = vmatprep.subr.mxu0 0.0
  %707 = vmatpush1.msra.mxu0 0.0
  %708 = vmatprep.subr.mxu0 0.0
  %709 = vmatpush1.msra.mxu0 0.0
  %710 = vmatprep.subr.mxu0 0.0
  %711 = vmatpush1.msra.mxu0 0.0
  %712 = vmatprep.subr.mxu0 0.0
  %713 = vmatpush1.msra.mxu0 0.0
  %714 = vmatprep.subr.mxu0 0.0
  %715 = vmatpush1.msra.mxu0 0.0
  %716 = vmatprep.subr.mxu0 0.0
  %717 = vmatpush1.msra.mxu0 0.0
  %718 = vmatprep.subr.mxu0 0.0
  %719 = vmatpush1.msra.mxu0 0.0
  %720 = vmatprep.subr.mxu0 0.0
  %721 = vmatpush1.msra.mxu0 0.0
  %722 = vmatprep.subr.mxu0 0.0
  %723 = vmatpush1.msra.mxu0 0.0
  %724 = vmatprep.subr.mxu0 0.0
  %725 = vmatpush1.msra.mxu0 0.0
  %726 = vmatprep.subr.mxu0 0.0
  %727 = vmatpush1.msra.mxu0 0.0
  %728 = vmatprep.subr.mxu0 0.0
  %729 = vmatpush1.msra.mxu0 0.0
  %730 = vmatprep.subr.mxu0 0.0
  %731 = vmatpush1.msra.mxu0 0.0
  %732 = vmatprep.subr.mxu0 0.0
  %733 = vmatpush1.msra.mxu0 0.0
  %734 = vmatprep.subr.mxu0 0.0
  %735 = vmatpush1.msra.mxu0 0.0
  %736 = vmatprep.subr.mxu0 0.0
  %737 = vmatpush1.msra.mxu0 0.0
  %738 = vmatprep.subr.mxu0 0.0
  %739 = vmatpush1.msra.mxu0 0.0
  %740 = vmatprep.subr.mxu0 0.0
  %741 = vmatpush1.msra.mxu0 0.0
  %742 = vmatprep.mubr.f32.mxu0 0.0
  %743 = vmatmul.mubr.f32.gmra.mrb[0].mxu0 %v676
  %v744 = vpop.f32.mrb[0].mxu0
  %v745 = vadd.f32 0.0, %v744
  %v746 = vpop.f32.mrb[0].mxu0
  %v747 = vadd.f32 0.0, %v746
  %748 = vdwg.mxu0
  %749 = vmatprep.subr.mxu0 %v654
  %750 = vmatpush1.msra.mxu0 %v653
  %751 = vmatprep.subr.mxu0 %v658
  %752 = vmatpush1.msra.mxu0 %v657
  %753 = vmatprep.subr.mxu0 %v662
  %754 = vmatpush1.msra.mxu0 %v661
  %755 = vmatprep.subr.mxu0 0.0
  %756 = vmatpush1.msra.mxu0 0.0
  %757 = vmatprep.subr.mxu0 0.0
  %758 = vmatpush1.msra.mxu0 0.0
  %759 = vmatprep.subr.mxu0 0.0
  %760 = vmatpush1.msra.mxu0 0.0
  %761 = vmatprep.subr.mxu0 0.0
  %762 = vmatpush1.msra.mxu0 0.0
  %763 = vmatprep.subr.mxu0 0.0
  %764 = vmatpush1.msra.mxu0 0.0
  %765 = vmatprep.subr.mxu0 0.0
  %766 = vmatpush1.msra.mxu0 0.0
  %767 = vmatprep.subr.mxu0 0.0
  %768 = vmatpush1.msra.mxu0 0.0
  %769 = vmatprep.subr.mxu0 0.0
  %770 = vmatpush1.msra.mxu0 0.0
  %771 = vmatprep.subr.mxu0 0.0
  %772 = vmatpush1.msra.mxu0 0.0
  %773 = vmatprep.subr.mxu0 0.0
  %774 = vmatpush1.msra.mxu0 0.0
  %775 = vmatprep.subr.mxu0 0.0
  %776 = vmatpush1.msra.mxu0 0.0
  %777 = vmatprep.subr.mxu0 0.0
  %778 = vmatpush1.msra.mxu0 0.0
  %779 = vmatprep.subr.mxu0 0.0
  %780 = vmatpush1.msra.mxu0 0.0
  %781 = vmatprep.subr.mxu0 0.0
  %782 = vmatpush1.msra.mxu0 0.0
  %783 = vmatprep.subr.mxu0 0.0
  %784 = vmatpush1.msra.mxu0 0.0
  %785 = vmatprep.subr.mxu0 0.0
  %786 = vmatpush1.msra.mxu0 0.0
  %787 = vmatprep.subr.mxu0 0.0
  %788 = vmatpush1.msra.mxu0 0.0
  %789 = vmatprep.subr.mxu0 0.0
  %790 = vmatpush1.msra.mxu0 0.0
  %791 = vmatprep.subr.mxu0 0.0
  %792 = vmatpush1.msra.mxu0 0.0
  %793 = vmatprep.subr.mxu0 0.0
  %794 = vmatpush1.msra.mxu0 0.0
  %795 = vmatprep.subr.mxu0 0.0
  %796 = vmatpush1.msra.mxu0 0.0
  %797 = vmatprep.subr.mxu0 0.0
  %798 = vmatpush1.msra.mxu0 0.0
  %799 = vmatprep.subr.mxu0 0.0
  %800 = vmatpush1.msra.mxu0 0.0
  %801 = vmatprep.subr.mxu0 0.0
  %802 = vmatpush1.msra.mxu0 0.0
  %803 = vmatprep.subr.mxu0 0.0
  %804 = vmatpush1.msra.mxu0 0.0
  %805 = vmatprep.subr.mxu0 0.0
  %806 = vmatpush1.msra.mxu0 0.0
  %807 = vmatprep.subr.mxu0 0.0
  %808 = vmatpush1.msra.mxu0 0.0
  %809 = vmatprep.subr.mxu0 0.0
  %810 = vmatpush1.msra.mxu0 0.0
  %811 = vmatprep.subr.mxu0 0.0
  %812 = vmatpush1.msra.mxu0 0.0
  %813 = vmatprep.mubr.f32.mxu0 0.0
  %814 = vmatmul.mubr.f32.gmra.mrb[0].mxu0 %v676
  %v815 = vpop.f32.mrb[0].mxu0
  %v816 = vadd.f32 0.0, %v815
  %v817 = vpop.f32.mrb[0].mxu0
  %v818 = vadd.f32 0.0, %v817
  %819 = vdwg.mxu0
  %v820 = vadd.f32 %v614, %v745
  %v821 = vadd.f32 %v615, %v747
  %v822 = vadd.f32 %v616, %v816
  %v823 = vadd.f32 %v617, %v818
  %v824 = vld [vmem:[%s5] sm:$0xf]
  %vm825 = vcmp.gt.f32.partialorder %v824, 0.5
  %v826 = vsel %vm825, 1, 0
  %v827 = vlaneseq
  %v828 = vshrl.u32 %v827, 7
  %v829 = vsub.s32 0, %v828
  %v830 = vrot.slane %v826, %v829
  %v831 = vlaneseq
  %v832 = vshrl.u32 %v831, 7
  %v833 = vsub.s32 1, %v832
  %v834 = vrot.slane %v826, %v833
  %v835 = vlaneseq
  %v836 = vshrl.u32 %v835, 7
  %v837 = vsub.s32 2, %v836
  %v838 = vrot.slane %v826, %v837
  %v839 = vlaneseq
  %v840 = vshrl.u32 %v839, 7
  %v841 = vsub.s32 3, %v840
  %v842 = vrot.slane %v826, %v841
  %vm843 = vcmp.eq.s32.totalorder %v830, 1
  %vm844 = vcmp.eq.s32.totalorder %v834, 1
  %vm845 = vcmp.eq.s32.totalorder %v838, 1
  %vm846 = vcmp.eq.s32.totalorder %v842, 1
  %v847 = vsel %vm843, %v820, 0.0
  %v848 = vsel %vm844, %v821, 0.0
  %v849 = vsel %vm845, %v822, 0.0
  %v850 = vsel %vm846, %v823, 0.0
  %p851 = scmp.eq.s32.totalorder 0, 0
  // Predicated region
  $region26: #{down_forward.6} parent=0 // pred_check
    %p852 = pneg %p851
  $region27: #{down_forward.6} parent=0 // pred_check_branch
    %854 = sbr.rel (%p852) target = $region29
  $region28: #{down_forward.6} parent=0 // pred_region
    %855 = vst.msk [vmem:[%s7] sm:$0xff] %vm162, 0.0
    %856 = vst.msk [vmem:[%s8] sm:$0xff] %vm162, 0.0
  $region29: #{down_forward.6} parent=0 // pred_fallthru
    _
  %v857 = vld [vmem:[%s7] sm:$0xff]
  %v858 = vadd.f32 %v847, %v848
  %v859 = vadd.f32 %v858, %v849
  %v860 = vadd.f32 %v859, %v850
  %861 = vadd.xlane.f32.xlu0 %v860
  %v862 = vpop.xlane.xlu0 %861
  %v863 = vadd.f32 %v857, %v862
  %864 = vst.msk [vmem:[%s7] sm:$0xff] %vm162, %v863
  %v865 = vld [vmem:[%s8] sm:$0xff]
  %v866 = vmul.f32 %v847, %v847
  %v867 = vmul.f32 %v848, %v848
  %v868 = vmul.f32 %v849, %v849
  %v869 = vmul.f32 %v850, %v850
  %v870 = vadd.f32 %v866, %v867
  %v871 = vadd.f32 %v870, %v868
  %v872 = vadd.f32 %v871, %v869
  %873 = vadd.xlane.f32.xlu0 %v872
  %v874 = vpop.xlane.xlu0 %873
  %v875 = vadd.f32 %v865, %v874
  %876 = vst.msk [vmem:[%s8] sm:$0xff] %vm162, %v875
  %877 = vst [vmem:[%s6] sm:$0xff] %v847
  %878 = vst [vmem:[%s6 + $0x8] sm:$0xff] %v848
  %879 = vst [vmem:[%s6 + $0x10] sm:$0xff] %v849
  %880 = vst [vmem:[%s6 + $0x18] sm:$0xff] %v850
  // Predicated region
  $region30: #{down_forward.6} parent=0 // pred_check
    _
  $region31: #{down_forward.6} parent=0 // pred_check_branch
    %882 = sbr.rel (0) target = $region33
  $region32: #{down_forward.6} parent=0 // pred_region
    _
  $region33: #{down_forward.6} parent=0 // pred_fallthru
    _
  // Predicated region
  $region34: #{down_forward.6} parent=0 // pred_check
    _
  $region35: #{down_forward.6} parent=0 // pred_check_branch
    %884 = sbr.rel (0) target = $region37
  $region36: #{down_forward.6} parent=0 // pred_region
    _
  $region37: #{down_forward.6} parent=0 // pred_fallthru
    _
  // Predicated region
  $region38: #{down_forward.6} parent=0 // pred_check
    _
  $region39: #{down_forward.6} parent=0 // pred_check_branch
    %886 = sbr.rel (0) target = $region41
  $region40: #{down_forward.6} parent=0 // pred_region
    _
  $region41: #{down_forward.6} parent=0 // pred_fallthru
    _
  // Predicated region
  $region42: #{down_forward.6} parent=0 // pred_check
    _
  $region43: #{down_forward.6} parent=0 // pred_check_branch
    %888 = sbr.rel (0) target = $region45
  $region44: #{down_forward.6} parent=0 // pred_region
    _
  $region45: #{down_forward.6} parent=0 // pred_fallthru
    _
  // Predicated region
  $region46: #{down_forward.6} parent=0 // pred_check
    _
  $region47: #{down_forward.6} parent=0 // pred_check_branch
    %890 = sbr.rel (0) target = $region49
  $region48: #{down_forward.6} parent=0 // pred_region
    _
  $region49: #{down_forward.6} parent=0 // pred_fallthru
    _
  // Predicated region
  $region50: #{down_forward.6} parent=0 // pred_check
    _
  $region51: #{down_forward.6} parent=0 // pred_check_branch
    %892 = sbr.rel (0) target = $region53
  $region52: #{down_forward.6} parent=0 // pred_region
    _
  $region53: #{down_forward.6} parent=0 // pred_fallthru
    _

</llo_original>
